<compile_context>
chip_gen: v7x
topology: tpu7x:2x2x1
jax: 0.10.0
libtpu: 0.0.40
codegen_flags: <defaults>
</compile_context>

<pallas_src>
import math

import numpy as np
import jax
import jax.numpy as jnp
from jax.experimental import pallas as pl
from jax.experimental.pallas import tpu as pltpu

# ----------------- config (small, shapes consistent with the module) -----------------
VOCAB = 64
HIDDEN = 128          # bert_config.hidden_size
NUM_HEADS = 4
HEAD_DIM = HIDDEN // NUM_HEADS
FFN = 256
NUM_LAYERS = 2
MAX_SEQ_LEN = 8       # args.max_seq_len
NUM_TAGS = 4          # len(args.label2id)
BATCH = 2
LSTM_HIDDEN = 128     # self.lstm_hiden
MAX_POS = 32
LN_EPS = 1e-12

T_VALID = NUM_TAGS + MAX_SEQ_LEN      # 12 real positions (labels + tokens)
T_PAD = 16                            # padded to a multiple of 8 for sublane alignment

VMEM = pltpu.MemorySpace.VMEM


def _vmem_spec():
    return pl.BlockSpec(memory_space=VMEM)


# ============================== small math helpers ==============================
def _ln(x, g, b):
    mu = jnp.mean(x, axis=-1, keepdims=True)
    var = jnp.mean((x - mu) ** 2, axis=-1, keepdims=True)
    return (x - mu) * jax.lax.rsqrt(var + LN_EPS) * g + b


def _softmax_last(x):
    mx = jnp.max(x, axis=-1, keepdims=True)
    e = jnp.exp(x - mx)
    s = jnp.sum(e, axis=-1, keepdims=True)
    return e * pl.reciprocal(s, approx=True)


# ============================== label representation ==============================
# The entire sememe / GCN / attention path runs as ONE Pallas call of dense matmuls.
def _label_rep_kernel(emb_ref, node_avg_ref, adj_ref, gcnw_ref, gcnb_ref,
                      word_sel_ref, sense_sel_ref, rep_ref, grp_ref,
                      smask_ref, kinv_ref, wavg_ref, hasw_ref, out_ref):
    emb = emb_ref[...]                                                      # (V, H)
    # mean token embedding per graph node (selection/averaging matrix @ emb)
    node_vecs = jnp.dot(node_avg_ref[...], emb, preferred_element_type=jnp.float32)
    # GCN: relu(adj_row0 @ (nodes @ W) + b); only row 0 of adj@support is consumed.
    support = jnp.dot(node_vecs, gcnw_ref[...], preferred_element_type=jnp.float32)
    sense_out = jnp.maximum(
        jnp.dot(adj_ref[...], support, preferred_element_type=jnp.float32)
        + gcnb_ref[...], 0.0)                                               # (Ns, H)

    s_words = jnp.dot(word_sel_ref[...], emb, preferred_element_type=jnp.float32)   # (Nw, H)
    sense_g = jnp.dot(sense_sel_ref[...], sense_out,
                      preferred_element_type=jnp.float32)                   # (Nw*K, H)
    s_rep = jnp.dot(rep_ref[...], s_words, preferred_element_type=jnp.float32)

    # F.pairwise_distance(s, sememe_tensor, p=2), eps=1e-6
    diff = s_rep - sense_g + 1e-6
    dist = jnp.sqrt(jnp.sum(diff * diff, axis=-1, keepdims=True))           # (Nw*K, 1)
    dm = dist + smask_ref[...]                                              # invalid -> -1e30
    gmax = jnp.max(dm, keepdims=True)                                       # (1, 1)
    e = jnp.exp(dm - gmax)                                                  # (Nw*K, 1)
    ew = jnp.broadcast_to(e, (e.shape[0], sense_g.shape[1]))                # (Nw*K, H)
    # per-word softmax denominator, replicated back to sense slots (matmuls, N=128)
    gsum_w = jnp.dot(grp_ref[...], ew, preferred_element_type=jnp.float32)  # (Nw, H)
    gsum = jnp.dot(rep_ref[...], gsum_w, preferred_element_type=jnp.float32)
    att_sense = ew / jnp.maximum(gsum, 1e-30) * sense_g                     # att * sememe
    # mean over senses of att*sememe, then mean([that, s], 0)
    v1 = jnp.dot(grp_ref[...], att_sense,
                 preferred_element_type=jnp.float32) * kinv_ref[...]        # (Nw, H)
    word_repr = 0.5 * (v1 + s_words)
    lbl = jnp.dot(wavg_ref[...], word_repr, preferred_element_type=jnp.float32)   # (Nl, H)
    out_ref[...] = jnp.where(hasw_ref[...] > 0, lbl, 1.0)


def build_label_structures(label_ids, vocab=VOCAB):
    """Host-side single walk of the sememe tree -> dense numpy selection matrices."""
    node_rows, adj_blocks = [], []
    word_rows, word_nsense, word_first = [], [], []
    label_word_idx = []
    n_nodes = n_senses = 0
    for label_words in label_ids:
        widx = []
        for word_list in label_words:
            if not word_list:
                continue
            word_tok, senses = word_list[0], word_list[1]
            if len(senses) == 0:
                continue                      # word without senses never enters span
            first = n_senses
            for nodes, adj in senses:
                n = len(nodes)
                for toks in nodes:
                    row = np.zeros((vocab,), np.float32)
                    for t in toks:
                        row[int(t)] += 1.0 / len(toks)
                    node_rows.append(row)
                adj_blocks.append((n_nodes, [float(v) for v in adj[0]], n))
                n_nodes += n
                n_senses += 1
            wrow = np.zeros((vocab,), np.float32)
            wrow[int(word_tok[0])] = 1.0      # TODO(synk): multi-token label words unsupported
            word_rows.append(wrow)
            word_first.append(first)
            word_nsense.append(len(senses))
            widx.append(len(word_rows) - 1)
        label_word_idx.append(widx)

    n_labels = len(label_ids)
    n_words = len(word_rows)
    if n_words == 0:
        return None
    kmax = max(word_nsense)
    node_avg = np.stack(node_rows, 0)                                   # (Nn, V)
    adj = np.zeros((n_senses, n_nodes), np.float32)
    for si, (off, row0, n) in enumerate(adj_blocks):
        adj[si, off:off + n] = row0
    word_sel = np.stack(word_rows, 0)                                   # (Nw, V)
    nwk = n_words * kmax
    sense_sel = np.zeros((nwk, n_senses), np.float32)
    rep = np.zeros((nwk, n_words), np.float32)
    grp = np.zeros((n_words, nwk), np.float32)
    smask = np.full((nwk, 1), -1e30, np.float32)
    kinv = np.zeros((n_words, 1), np.float32)
    for w in range(n_words):
        kinv[w, 0] = 1.0 / word_nsense[w]
        for k in range(kmax):
            slot = w * kmax + k
            rep[slot, w] = 1.0
            grp[w, slot] = 1.0
            if k < word_nsense[w]:
                sense_sel[slot, word_first[w] + k] = 1.0
                smask[slot, 0] = 0.0
    wavg = np.zeros((n_labels, n_words), np.float32)
    hasw = np.zeros((n_labels, 1), np.float32)
    for li, widx in enumerate(label_word_idx):
        if widx:
            hasw[li, 0] = 1.0
            for w in widx:
                wavg[li, w] = 1.0 / len(widx)
    return dict(node_avg=jnp.asarray(node_avg), adj=jnp.asarray(adj),
                word_sel=jnp.asarray(word_sel), sense_sel=jnp.asarray(sense_sel),
                rep=jnp.asarray(rep), grp=jnp.asarray(grp), smask=jnp.asarray(smask),
                kinv=jnp.asarray(kinv), wavg=jnp.asarray(wavg), hasw=jnp.asarray(hasw),
                n_labels=n_labels)


def compute_label_representation(params, structs):
    if structs is None:
        return jnp.ones((NUM_TAGS, HIDDEN), jnp.float32)
    args = (params['sememe_emb'], structs['node_avg'], structs['adj'],
            params['gcn_w'], params['gcn_b'],
            structs['word_sel'], structs['sense_sel'], structs['rep'], structs['grp'],
            structs['smask'], structs['kinv'], structs['wavg'], structs['hasw'])
    return pl.pallas_call(
        _label_rep_kernel,
        out_shape=jax.ShapeDtypeStruct((structs['n_labels'], HIDDEN), jnp.float32),
        in_specs=[_vmem_spec()] * len(args),
        out_specs=_vmem_spec(),
    )(*args)


# ============================== fused forward kernel ==============================
def _fused_kernel(we_ref, lbl_ref, pt_ref, amask_ref, labels_ref,
                  embg_ref, embb_ref,
                  wqkv_ref, bqkv_ref, wo_ref, bo_ref,
                  ln1g_ref, ln1b_ref, w1_ref, b1_ref, w2_ref, b2_ref,
                  ln2g_ref, ln2b_ref,
                  wih_ref, bih_ref, whh_ref,
                  linw_ref, linb_ref,
                  loss_ref, probs_ref,
                  xbuf, lstm_buf):
    B, S, H = we_ref.shape
    TP = T_PAD
    HL = LSTM_HIDDEN
    NT = NUM_TAGS
    bf = jnp.bfloat16

    embg = embg_ref[...]
    embb = embb_ref[...]
    pt = pt_ref[...]                                     # (TP, H) = pos + type (precomputed)

    # ---- BERT embeddings on raw token ids (LN #1) ----
    raw = we_ref[...] + pt[None, :S, :]
    raw = _ln(raw, embg, embb)

    # ---- assemble [label | raw | pad] in VMEM scratch, embeddings (LN #2) ----
    xbuf[:, 0:NT, :] = jnp.broadcast_to(lbl_ref[...][None], (B, NT, H))
    xbuf[:, NT:NT + S, :] = raw
    xbuf[:, NT + S:TP, :] = jnp.zeros((B, TP - NT - S, H), jnp.float32)
    x = xbuf[...] + pt[None, :, :]
    xf = _ln(x.reshape(B * TP, H), embg, embb)           # (B*TP, H) f32

    # ---- BERT encoder layers (head-batched attention, bf16 MXU operands) ----
    amask = amask_ref[...]                               # (NH*B, 1, TP)  head-major
    for l in range(NUM_LAYERS):
        xb = xf.astype(bf)
        qkv = jnp.dot(xb, wqkv_ref[l], preferred_element_type=jnp.float32) + bqkv_ref[l]
        qkv3 = qkv.reshape(B, TP, 3 * H)

        q_all = jnp.concatenate(
            [qkv3[:, :, h * HEAD_DIM:(h + 1) * HEAD_DIM] for h in range(NUM_HEADS)],
            axis=0).astype(bf)                           # (NH*B, TP, HD)
        k_all = jnp.concatenate(
            [qkv3[:, :, H + h * HEAD_DIM:H + (h + 1) * HEAD_DIM] for h in range(NUM_HEADS)],
            axis=0).astype(bf)
        v_all = jnp.concatenate(
            [qkv3[:, :, 2 * H + h * HEAD_DIM:2 * H + (h + 1) * HEAD_DIM] for h in range(NUM_HEADS)],
            axis=0).astype(bf)

        # scale folded into Q columns of wqkv at prep time
        sc = jnp.einsum('bqd,bkd->bqk', q_all, k_all,
                        preferred_element_type=jnp.float32) + amask       # (NH*B, TP, TP)
        p = _softmax_last(sc).astype(bf)
        ctx = jnp.einsum('bqk,bkd->bqd', p, v_all,
                         preferred_element_type=jnp.float32)              # (NH*B, TP, HD)
        # reassemble all heads into a 128-lane slab -> ONE output projection matmul
        ctx_cat = jnp.concatenate([ctx[h * B:(h + 1) * B] for h in range(NUM_HEADS)],
                                  axis=-1)                                # (B, TP, H)
        attn = jnp.dot(ctx_cat.reshape(B * TP, H).astype(bf), wo_ref[l],
                       preferred_element_type=jnp.float32) + bo_ref[l]

        h1 = _ln(xf + attn, ln1g_ref[l], ln1b_ref[l])
        ff = jax.nn.gelu(jnp.dot(h1.astype(bf), w1_ref[l],
                                 preferred_element_type=jnp.float32) + b1_ref[l])
        ff = jnp.dot(ff.astype(bf), w2_ref[l],
                     preferred_element_type=jnp.float32) + b2_ref[l]
        xf = _ln(h1 + ff, ln2g_ref[l], ln2b_ref[l])

    # ---- BiLSTM: input projection hoisted; fwd+bwd merged into one block-diag matmul
    #      per step; outputs streamed into VMEM scratch.
    pg = jnp.dot(xf.astype(bf), wih_ref[...],
                 preferred_element_type=jnp.float32) + bih_ref[...]       # (B*TP, 8HL)
    pg3 = pg.reshape(B, TP, 8 * HL)
    whh = whh_ref[...]                                                    # (2HL, 8HL) bf16

    h_cat = jnp.zeros((B, 2 * HL), jnp.float32)
    c_f = jnp.zeros((B, HL), jnp.float32)
    c_b = jnp.zeros((B, HL), jnp.float32)
    for s in range(T_VALID):
        tf_ = s
        tb_ = T_VALID - 1 - s
        rec = jnp.dot(h_cat.astype(bf), whh, preferred_element_type=jnp.float32)  # (B, 8HL)
        g_f = rec[:, 0:4 * HL] + pg3[:, tf_, 0:4 * HL]
        g_b = rec[:, 4 * HL:8 * HL] + pg3[:, tb_, 4 * HL:8 * HL]
        i_f = jax.nn.sigmoid(g_f[:, 0:HL])
        f_f = jax.nn.sigmoid(g_f[:, HL:2 * HL])
        gg_f = jnp.tanh(g_f[:, 2 * HL:3 * HL])
        o_f = jax.nn.sigmoid(g_f[:, 3 * HL:4 * HL])
        i_b = jax.nn.sigmoid(g_b[:, 0:HL])
        f_b = jax.nn.sigmoid(g_b[:, HL:2 * HL])
        gg_b = jnp.tanh(g_b[:, 2 * HL:3 * HL])
        o_b = jax.nn.sigmoid(g_b[:, 3 * HL:4 * HL])
        c_f = f_f * c_f + i_f * gg_f
        c_b = f_b * c_b + i_b * gg_b
        h_f = o_f * jnp.tanh(c_f)
        h_b = o_b * jnp.tanh(c_b)
        lstm_buf[:, tf_, 0:HL] = h_f
        lstm_buf[:, tb_, HL:2 * HL] = h_b
        h_cat = jnp.concatenate([h_f, h_b], axis=-1)

    # ---- token rows via one sublane slice, linear + CE / softmax head ----
    tok = lstm_buf[:, NT:NT + S, :].reshape(B * S, 2 * HL)
    lin = jnp.dot(tok.astype(bf), linw_ref[...],
                  preferred_element_type=jnp.float32) + linb_ref[...]     # (B*S, H)

    labels = labels_ref[...]                                              # (B*S, 1) int32
    mx = jnp.max(lin, axis=-1, keepdims=True)
    e = jnp.exp(lin - mx)
    ssum = jnp.sum(e, axis=-1, keepdims=True)
    probs_ref[...] = e / ssum                                             # softmax(dim=-1)

    lse = mx + jnp.log(ssum)
    col = jax.lax.broadcasted_iota(jnp.int32, lin.shape, 1)
    onehot = (col == labels).astype(jnp.float32)
    picked = jnp.sum(lin * onehot, axis=-1, keepdims=True)
    loss_ref[...] = jnp.mean(lse - picked, keepdims=True)                 # CrossEntropyLoss (mean)


def fused_forward(kp, we, label_rep, add_mask_h, labels2d):
    B = we.shape[0]
    n_out = B * MAX_SEQ_LEN
    args = (we, label_rep, kp['pt'], add_mask_h, labels2d,
            kp['emb_ln_g'], kp['emb_ln_b'],
            kp['wqkv'], kp['bqkv'], kp['wo'], kp['bo'],
            kp['ln1_g'], kp['ln1_b'], kp['w1'], kp['b1'], kp['w2'], kp['b2'],
            kp['ln2_g'], kp['ln2_b'],
            kp['wih'], kp['bih'], kp['whh_blk'],
            kp['lin_w'], kp['lin_b'])

    BTP = B * T_PAD
    mm = lambda m, k, n: 2 * m * k * n
    flops = int(
        NUM_LAYERS * (mm(BTP, HIDDEN, 3 * HIDDEN)
                      + 2 * NUM_HEADS * B * mm(T_PAD, HEAD_DIM, T_PAD)
                      + mm(BTP, HIDDEN, HIDDEN)
                      + mm(BTP, HIDDEN, FFN) + mm(BTP, FFN, HIDDEN))
        + mm(BTP, HIDDEN, 8 * LSTM_HIDDEN)
        + T_VALID * mm(B, 2 * LSTM_HIDDEN, 8 * LSTM_HIDDEN)
        + mm(n_out, 2 * LSTM_HIDDEN, HIDDEN))
    transcend = int(NUM_LAYERS * (NUM_HEADS * B * T_PAD * T_PAD + BTP * FFN)
                    + T_VALID * B * 10 * LSTM_HIDDEN + n_out * HIDDEN)
    nbytes = int(sum(int(np.prod(a.shape)) * a.dtype.itemsize for a in args)
                 + 4 * (1 + n_out * HIDDEN))

    loss, probs = pl.pallas_call(
        _fused_kernel,
        out_shape=(jax.ShapeDtypeStruct((1, 1), jnp.float32),
                   jax.ShapeDtypeStruct((n_out, HIDDEN), jnp.float32)),
        in_specs=[_vmem_spec()] * len(args),
        out_specs=(_vmem_spec(), _vmem_spec()),
        scratch_shapes=[pltpu.VMEM((B, T_PAD, HIDDEN), jnp.float32),
                        pltpu.VMEM((B, T_PAD, 2 * LSTM_HIDDEN), jnp.float32)],
        cost_estimate=pl.CostEstimate(flops=flops, transcendentals=transcend,
                                      bytes_accessed=nbytes),
    )(*args)
    return loss[0, 0], probs


# ============================== parameters ==============================
def init_params(key):
    ks = iter(jax.random.split(key, 64))

    def nrm(shape, scale=0.02):
        return (scale * jax.random.normal(next(ks), shape)).astype(jnp.float32)

    p = {}
    p['sememe_emb'] = nrm((VOCAB, HIDDEN), 1.0)
    stdv = 1.0 / math.sqrt(HIDDEN)
    p['gcn_w'] = jax.random.uniform(next(ks), (HIDDEN, HIDDEN), jnp.float32, -stdv, stdv)
    p['gcn_b'] = jax.random.uniform(next(ks), (1, HIDDEN), jnp.float32, -stdv, stdv)
    p['word_emb'] = nrm((VOCAB, HIDDEN))
    p['pos_emb'] = nrm((MAX_POS, HIDDEN))
    p['type_emb'] = nrm((1, HIDDEN))
    p['emb_ln_g'] = jnp.ones((1, HIDDEN), jnp.float32)
    p['emb_ln_b'] = jnp.zeros((1, HIDDEN), jnp.float32)

    def stack(fn):
        return jnp.stack([fn() for _ in range(NUM_LAYERS)], axis=0)

    p['wqkv'] = stack(lambda: nrm((HIDDEN, 3 * HIDDEN)))
    p['bqkv'] = jnp.zeros((NUM_LAYERS, 1, 3 * HIDDEN), jnp.float32)
    p['wo'] = stack(lambda: nrm((HIDDEN, HIDDEN)))
    p['bo'] = jnp.zeros((NUM_LAYERS, 1, HIDDEN), jnp.float32)
    p['ln1_g'] = jnp.ones((NUM_LAYERS, 1, HIDDEN), jnp.float32)
    p['ln1_b'] = jnp.zeros((NUM_LAYERS, 1, HIDDEN), jnp.float32)
    p['w1'] = stack(lambda: nrm((HIDDEN, FFN)))
    p['b1'] = jnp.zeros((NUM_LAYERS, 1, FFN), jnp.float32)
    p['w2'] = stack(lambda: nrm((FFN, HIDDEN)))
    p['b2'] = jnp.zeros((NUM_LAYERS, 1, HIDDEN), jnp.float32)
    p['ln2_g'] = jnp.ones((NUM_LAYERS, 1, HIDDEN), jnp.float32)
    p['ln2_b'] = jnp.zeros((NUM_LAYERS, 1, HIDDEN), jnp.float32)

    kk = 1.0 / math.sqrt(LSTM_HIDDEN)
    wih_f = jax.random.uniform(next(ks), (HIDDEN, 4 * LSTM_HIDDEN), jnp.float32, -kk, kk)
    wih_b = jax.random.uniform(next(ks), (HIDDEN, 4 * LSTM_HIDDEN), jnp.float32, -kk, kk)
    p['wih'] = jnp.concatenate([wih_f, wih_b], axis=1)               # (H, 8*HL)
    b_f = jax.random.uniform(next(ks), (1, 4 * LSTM_HIDDEN), jnp.float32, -kk, kk)
    b_b = jax.random.uniform(next(ks), (1, 4 * LSTM_HIDDEN), jnp.float32, -kk, kk)
    p['bih'] = jnp.concatenate([b_f, b_b], axis=1)                   # (1, 8*HL)
    p['whh_f'] = jax.random.uniform(next(ks), (LSTM_HIDDEN, 4 * LSTM_HIDDEN), jnp.float32, -kk, kk)
    p['whh_b'] = jax.random.uniform(next(ks), (LSTM_HIDDEN, 4 * LSTM_HIDDEN), jnp.float32, -kk, kk)
    kl = 1.0 / math.sqrt(2 * LSTM_HIDDEN)
    p['lin_w'] = jax.random.uniform(next(ks), (2 * LSTM_HIDDEN, HIDDEN), jnp.float32, -kl, kl)
    p['lin_b'] = jax.random.uniform(next(ks), (1, HIDDEN), jnp.float32, -kl, kl)
    return p


def prepare_params(p):
    """Kernel-ready params: attention scale folded into Wq, bf16 MXU weights,
    block-diagonal fwd+bwd LSTM recurrent weight, pos+type precombined."""
    scale = 1.0 / math.sqrt(HEAD_DIM)
    wqkv = p['wqkv'].at[:, :, :HIDDEN].multiply(scale)
    bqkv = p['bqkv'].at[:, :, :HIDDEN].multiply(scale)
    hl = LSTM_HIDDEN
    whh_blk = jnp.zeros((2 * hl, 8 * hl), jnp.float32)
    whh_blk = whh_blk.at[:hl, :4 * hl].set(p['whh_f'])
    whh_blk = whh_blk.at[hl:, 4 * hl:].set(p['whh_b'])
    bf = jnp.bfloat16
    return {
        'pt': p['pos_emb'][:T_PAD] + p['type_emb'],
        'emb_ln_g': p['emb_ln_g'], 'emb_ln_b': p['emb_ln_b'],
        'wqkv': wqkv.astype(bf), 'bqkv': bqkv,
        'wo': p['wo'].astype(bf), 'bo': p['bo'],
        'ln1_g': p['ln1_g'], 'ln1_b': p['ln1_b'],
        'w1': p['w1'].astype(bf), 'b1': p['b1'],
        'w2': p['w2'].astype(bf), 'b2': p['b2'],
        'ln2_g': p['ln2_g'], 'ln2_b': p['ln2_b'],
        'wih': p['wih'].astype(bf), 'bih': p['bih'],
        'whh_blk': whh_blk.astype(bf),
        'lin_w': p['lin_w'].astype(bf), 'lin_b': p['lin_b'],
    }


# ============================== full forward ==============================
def bert_ner_forward(params, kparams, label_structs, input_ids, attention_mask, labels):
    label_representation = compute_label_representation(params, label_structs)   # (NUM_TAGS, H)

    B, S = input_ids.shape
    we = params['word_emb'][input_ids]                                            # (B, S, H)

    # attention mask: label positions=1, token positions=attention_mask, pad positions=0
    all_mask = jnp.concatenate(
        [jnp.ones((B, NUM_TAGS), jnp.float32),
         attention_mask.astype(jnp.float32),
         jnp.zeros((B, T_PAD - T_VALID), jnp.float32)], axis=1)                   # (B, TP)
    add_mask = ((1.0 - all_mask) * -10000.0)[:, None, :]                          # (B, 1, TP)
    add_mask_h = jnp.concatenate([add_mask] * NUM_HEADS, axis=0)                  # (NH*B, 1, TP)

    labels_flat = labels.reshape(-1)
    labels2d = labels_flat.reshape(B * S, 1).astype(jnp.int32)

    loss, probs = fused_forward(kparams, we, label_representation, add_mask_h, labels2d)
    logits = jnp.argmax(probs, axis=-1).reshape(B, MAX_SEQ_LEN)   # == argmax(softmax(seq_out), -1)
    return {'logits': logits, 'labels': labels_flat, 'loss': loss, 'probs': probs}


# ============================== main ==============================
if __name__ == "__main__":
    key = jax.random.PRNGKey(0)
    pkey, ikey, lkey = jax.random.split(key, 3)
    params = init_params(pkey)
    kparams = prepare_params(params)

    # synthetic, deterministic label -> sememe-tree structure
    # label_ids[label][word] = (word_token_ids, senses); sense = (node_token_lists, adj)
    label_ids = []
    tid = 1
    for _lbl in range(NUM_TAGS):
        words = []
        for _w in range(2):
            word_tok = [tid % VOCAB]
            tid += 1
            senses = []
            for _s in range(2):
                nodes = []
                for _n in range(3):
                    nodes.append([tid % VOCAB, (tid + 3) % VOCAB])
                    tid += 1
                adj = [[0.5, 0.5, 0.0],
                       [1.0 / 3, 1.0 / 3, 1.0 / 3],
                       [0.0, 0.5, 0.5]]
                senses.append((nodes, adj))
            words.append((word_tok, senses))
        label_ids.append(words)

    label_structs = build_label_structures(label_ids)

    input_ids = jax.random.randint(ikey, (BATCH, MAX_SEQ_LEN), 0, VOCAB, dtype=jnp.int32)
    attention_mask = jnp.ones((BATCH, MAX_SEQ_LEN), jnp.float32).at[1, -2:].set(0.0)
    labels = jax.random.randint(lkey, (BATCH, MAX_SEQ_LEN), 0, HIDDEN, dtype=jnp.int32)

    out = bert_ner_forward(params, kparams, label_structs, input_ids, attention_mask, labels)
    jax.block_until_ready((out['loss'], out['probs'], out['logits']))
    print("KERNEL_OK")
</pallas_src>

<mosaic_0001>
module attributes {stable_mosaic.version = 11 : i64} {
  func.func @_label_rep_kernel(%arg0: memref<64x128xf32, #tpu.memory_space<vmem>>, %arg1: memref<48x64xf32, #tpu.memory_space<vmem>>, %arg2: memref<16x48xf32, #tpu.memory_space<vmem>>, %arg3: memref<128x128xf32, #tpu.memory_space<vmem>>, %arg4: memref<1x128xf32, #tpu.memory_space<vmem>>, %arg5: memref<8x64xf32, #tpu.memory_space<vmem>>, %arg6: memref<16x16xf32, #tpu.memory_space<vmem>>, %arg7: memref<16x8xf32, #tpu.memory_space<vmem>>, %arg8: memref<8x16xf32, #tpu.memory_space<vmem>>, %arg9: memref<16x1xf32, #tpu.memory_space<vmem>>, %arg10: memref<8x1xf32, #tpu.memory_space<vmem>>, %arg11: memref<4x8xf32, #tpu.memory_space<vmem>>, %arg12: memref<4x1xf32, #tpu.memory_space<vmem>>, %arg13: memref<4x128xf32, #tpu.memory_space<vmem>>) attributes {dimension_semantics = [], scalar_prefetch = 0 : i64, scratch_operands = 0 : i64, tpu.core_type = #tpu.core_type<tc>} {
    %c0 = arith.constant 0 : index
    %c0_0 = arith.constant 0 : index
    %0 = vector.load %arg0[%c0, %c0_0] : memref<64x128xf32, #tpu.memory_space<vmem>>, vector<64x128xf32>
    %c0_1 = arith.constant 0 : index
    %c0_2 = arith.constant 0 : index
    %1 = vector.load %arg1[%c0_1, %c0_2] : memref<48x64xf32, #tpu.memory_space<vmem>>, vector<48x64xf32>
    %cst = arith.constant dense<0.000000e+00> : vector<48x128xf32>
    %2 = tpu.matmul %1, %0, %cst {dimension_numbers = #tpu.dot_dimension_numbers<[1], [0], [0], [1], [0, 0, 1, 1], [], []>} : vector<48x64xf32>, vector<64x128xf32>, vector<48x128xf32> -> vector<48x128xf32>
    %c0_3 = arith.constant 0 : index
    %c0_4 = arith.constant 0 : index
    %3 = vector.load %arg3[%c0_3, %c0_4] : memref<128x128xf32, #tpu.memory_space<vmem>>, vector<128x128xf32>
    %cst_5 = arith.constant dense<0.000000e+00> : vector<48x128xf32>
    %4 = tpu.matmul %2, %3, %cst_5 {dimension_numbers = #tpu.dot_dimension_numbers<[1], [0], [0], [1], [0, 0, 1, 1], [], []>} : vector<48x128xf32>, vector<128x128xf32>, vector<48x128xf32> -> vector<48x128xf32>
    %c0_6 = arith.constant 0 : index
    %c0_7 = arith.constant 0 : index
    %5 = vector.load %arg2[%c0_6, %c0_7] : memref<16x48xf32, #tpu.memory_space<vmem>>, vector<16x48xf32>
    %cst_8 = arith.constant dense<0.000000e+00> : vector<16x128xf32>
    %6 = tpu.matmul %5, %4, %cst_8 {dimension_numbers = #tpu.dot_dimension_numbers<[1], [0], [0], [1], [0, 0, 1, 1], [], []>} : vector<16x48xf32>, vector<48x128xf32>, vector<16x128xf32> -> vector<16x128xf32>
    %c0_9 = arith.constant 0 : index
    %c0_10 = arith.constant 0 : index
    %7 = vector.load %arg4[%c0_9, %c0_10] : memref<1x128xf32, #tpu.memory_space<vmem>>, vector<1x128xf32>
    %8 = vector.broadcast %7 : vector<1x128xf32> to vector<16x128xf32>
    %9 = arith.addf %6, %8 : vector<16x128xf32>
    %cst_11 = arith.constant 0.000000e+00 : f32
    %10 = vector.broadcast %cst_11 : f32 to vector<16x128xf32>
    %11 = arith.maximumf %9, %10 : vector<16x128xf32>
    %c0_12 = arith.constant 0 : index
    %c0_13 = arith.constant 0 : index
    %12 = vector.load %arg5[%c0_12, %c0_13] : memref<8x64xf32, #tpu.memory_space<vmem>>, vector<8x64xf32>
    %cst_14 = arith.constant dense<0.000000e+00> : vector<8x128xf32>
    %13 = tpu.matmul %12, %0, %cst_14 {dimension_numbers = #tpu.dot_dimension_numbers<[1], [0], [0], [1], [0, 0, 1, 1], [], []>} : vector<8x64xf32>, vector<64x128xf32>, vector<8x128xf32> -> vector<8x128xf32>
    %c0_15 = arith.constant 0 : index
    %c0_16 = arith.constant 0 : index
    %14 = vector.load %arg6[%c0_15, %c0_16] : memref<16x16xf32, #tpu.memory_space<vmem>>, vector<16x16xf32>
    %cst_17 = arith.constant dense<0.000000e+00> : vector<16x128xf32>
    %15 = tpu.matmul %14, %11, %cst_17 {dimension_numbers = #tpu.dot_dimension_numbers<[1], [0], [0], [1], [0, 0, 1, 1], [], []>} : vector<16x16xf32>, vector<16x128xf32>, vector<16x128xf32> -> vector<16x128xf32>
    %c0_18 = arith.constant 0 : index
    %c0_19 = arith.constant 0 : index
    %16 = vector.load %arg7[%c0_18, %c0_19] : memref<16x8xf32, #tpu.memory_space<vmem>>, vector<16x8xf32>
    %cst_20 = arith.constant dense<0.000000e+00> : vector<16x128xf32>
    %17 = tpu.matmul %16, %13, %cst_20 {dimension_numbers = #tpu.dot_dimension_numbers<[1], [0], [0], [1], [0, 0, 1, 1], [], []>} : vector<16x8xf32>, vector<8x128xf32>, vector<16x128xf32> -> vector<16x128xf32>
    %18 = arith.subf %17, %15 : vector<16x128xf32>
    %cst_21 = arith.constant 9.99999997E-7 : f32
    %19 = vector.broadcast %cst_21 : f32 to vector<16x128xf32>
    %20 = arith.addf %18, %19 : vector<16x128xf32>
    %21 = arith.mulf %20, %20 : vector<16x128xf32>
    %cst_22 = arith.constant dense<0.000000e+00> : vector<16xf32>
    %22 = vector.multi_reduction <add>, %21, %cst_22 [1] : vector<16x128xf32> to vector<16xf32>
    %23 = vector.shape_cast %22 : vector<16xf32> to vector<16x1xf32>
    %24 = math.sqrt %23 : vector<16x1xf32>
    %c0_23 = arith.constant 0 : index
    %c0_24 = arith.constant 0 : index
    %25 = vector.load %arg9[%c0_23, %c0_24] : memref<16x1xf32, #tpu.memory_space<vmem>>, vector<16x1xf32>
    %26 = arith.addf %24, %25 : vector<16x1xf32>
    %27 = vector.shape_cast %26 : vector<16x1xf32> to vector<1x16x1xf32>
    %cst_25 = arith.constant dense<0xFF800000> : vector<1xf32>
    %28 = vector.multi_reduction <maximumf>, %27, %cst_25 [1, 2] : vector<1x16x1xf32> to vector<1xf32>
    %29 = vector.shape_cast %28 : vector<1xf32> to vector<1x1x1xf32>
    %30 = vector.extract %29[0, 0, 0] : f32 from vector<1x1x1xf32>
    %31 = vector.broadcast %30 : f32 to vector<1x1xf32>
    %32 = vector.broadcast %31 : vector<1x1xf32> to vector<16x1xf32>
    %33 = arith.subf %26, %32 : vector<16x1xf32>
    %34 = math.exp %33 : vector<16x1xf32>
    %35 = vector.shape_cast %34 : vector<16x1xf32> to vector<16x1xf32>
    %36 = vector.broadcast %35 : vector<16x1xf32> to vector<16x128xf32>
    %c0_26 = arith.constant 0 : index
    %c0_27 = arith.constant 0 : index
    %37 = vector.load %arg8[%c0_26, %c0_27] : memref<8x16xf32, #tpu.memory_space<vmem>>, vector<8x16xf32>
    %cst_28 = arith.constant dense<0.000000e+00> : vector<8x128xf32>
    %38 = tpu.matmul %37, %36, %cst_28 {dimension_numbers = #tpu.dot_dimension_numbers<[1], [0], [0], [1], [0, 0, 1, 1], [], []>} : vector<8x16xf32>, vector<16x128xf32>, vector<8x128xf32> -> vector<8x128xf32>
    %c0_29 = arith.constant 0 : index
    %c0_30 = arith.constant 0 : index
    %39 = vector.load %arg7[%c0_29, %c0_30] : memref<16x8xf32, #tpu.memory_space<vmem>>, vector<16x8xf32>
    %cst_31 = arith.constant dense<0.000000e+00> : vector<16x128xf32>
    %40 = tpu.matmul %39, %38, %cst_31 {dimension_numbers = #tpu.dot_dimension_numbers<[1], [0], [0], [1], [0, 0, 1, 1], [], []>} : vector<16x8xf32>, vector<8x128xf32>, vector<16x128xf32> -> vector<16x128xf32>
    %cst_32 = arith.constant 1.000000e-30 : f32
    %41 = vector.broadcast %cst_32 : f32 to vector<16x128xf32>
    %42 = arith.maximumf %40, %41 : vector<16x128xf32>
    %43 = arith.divf %36, %42 : vector<16x128xf32>
    %44 = arith.mulf %43, %15 : vector<16x128xf32>
    %c0_33 = arith.constant 0 : index
    %c0_34 = arith.constant 0 : index
    %45 = vector.load %arg8[%c0_33, %c0_34] : memref<8x16xf32, #tpu.memory_space<vmem>>, vector<8x16xf32>
    %cst_35 = arith.constant dense<0.000000e+00> : vector<8x128xf32>
    %46 = tpu.matmul %45, %44, %cst_35 {dimension_numbers = #tpu.dot_dimension_numbers<[1], [0], [0], [1], [0, 0, 1, 1], [], []>} : vector<8x16xf32>, vector<16x128xf32>, vector<8x128xf32> -> vector<8x128xf32>
    %c0_36 = arith.constant 0 : index
    %c0_37 = arith.constant 0 : index
    %47 = vector.load %arg10[%c0_36, %c0_37] : memref<8x1xf32, #tpu.memory_space<vmem>>, vector<8x1xf32>
    %48 = vector.broadcast %47 : vector<8x1xf32> to vector<8x128xf32>
    %49 = arith.mulf %46, %48 : vector<8x128xf32>
    %50 = arith.addf %49, %13 : vector<8x128xf32>
    %cst_38 = arith.constant 5.000000e-01 : f32
    %51 = vector.broadcast %cst_38 : f32 to vector<8x128xf32>
    %52 = arith.mulf %51, %50 : vector<8x128xf32>
    %c0_39 = arith.constant 0 : index
    %c0_40 = arith.constant 0 : index
    %53 = vector.load %arg11[%c0_39, %c0_40] : memref<4x8xf32, #tpu.memory_space<vmem>>, vector<4x8xf32>
    %cst_41 = arith.constant dense<0.000000e+00> : vector<4x128xf32>
    %54 = tpu.matmul %53, %52, %cst_41 {dimension_numbers = #tpu.dot_dimension_numbers<[1], [0], [0], [1], [0, 0, 1, 1], [], []>} : vector<4x8xf32>, vector<8x128xf32>, vector<4x128xf32> -> vector<4x128xf32>
    %c0_42 = arith.constant 0 : index
    %c0_43 = arith.constant 0 : index
    %55 = vector.load %arg12[%c0_42, %c0_43] : memref<4x1xf32, #tpu.memory_space<vmem>>, vector<4x1xf32>
    %cst_44 = arith.constant 0.000000e+00 : f32
    %56 = vector.broadcast %cst_44 : f32 to vector<4x1xf32>
    %57 = arith.cmpf ogt, %55, %56 : vector<4x1xf32>
    %cst_45 = arith.constant 1.000000e+00 : f32
    %58 = vector.shape_cast %57 : vector<4x1xi1> to vector<4x1xi1>
    %59 = vector.broadcast %58 : vector<4x1xi1> to vector<4x128xi1>
    %60 = vector.broadcast %cst_45 : f32 to vector<4x128xf32>
    %61 = arith.select %59, %54, %60 : vector<4x128xi1>, vector<4x128xf32>
    %c0_46 = arith.constant 0 : index
    %c0_47 = arith.constant 0 : index
    %62 = vector.load %arg13[%c0_46, %c0_47] : memref<4x128xf32, #tpu.memory_space<vmem>>, vector<4x128xf32>
    tpu.vector_store %arg13[%c0_46, %c0_47], %61 {strides = array<i32>} : memref<4x128xf32, #tpu.memory_space<vmem>>, vector<4x128xf32>,
    return
  }
}

</mosaic_0001>

<llo_original>
// kernel: tpu_custom_call.1
$region0: #{tpu_custom_call.1}
  #allocation0 [shape = 'u32[]', space=smem, size = 0x4, offset = 0x4, fixed_abs, tag = 'smem constant byte address 0x4 - core index']
  #allocation1 [shape = 'u32[144,128]{1,0:T(1,128)}', space=vmem, size = 0x12000, scoped, tag = 'internal scratch']
  %s0 = inlined_call_operand.hbm [shape: f32[64,128], index: 0, kind: input, shape index: {}]
  %s1 = inlined_call_operand.vmem [shape: f32[48,64], index: 1, kind: input, shape index: {}]
  %s2 = inlined_call_operand.hbm [shape: f32[16,48], index: 2, kind: input, shape index: {}]
  %s3 = inlined_call_operand.hbm [shape: f32[128,128], index: 3, kind: input, shape index: {}]
  %s4 = inlined_call_operand.vmem [shape: f32[1,128], index: 4, kind: input, shape index: {}]
  %s5 = inlined_call_operand.hbm [shape: f32[8,64], index: 5, kind: input, shape index: {}]
  %s6 = inlined_call_operand.vmem [shape: f32[16,16], index: 6, kind: input, shape index: {}]
  %s7 = inlined_call_operand.vmem [shape: f32[16,8], index: 7, kind: input, shape index: {}]
  %s8 = inlined_call_operand.vmem [shape: f32[8,16], index: 8, kind: input, shape index: {}]
  %s9 = inlined_call_operand.vmem [shape: f32[16,1], index: 9, kind: input, shape index: {}]
  %s10 = inlined_call_operand.vmem [shape: f32[8,1], index: 10, kind: input, shape index: {}]
  %s11 = inlined_call_operand.vmem [shape: f32[4,8], index: 11, kind: input, shape index: {}]
  %s12 = inlined_call_operand.vmem [shape: f32[4,1], index: 12, kind: input, shape index: {}]
  %s13 = inlined_call_operand.hbm [shape: f32[4,128], index: 13, kind: output, shape index: {}]
  %s14 = sld [smem:[#allocation0]]
  $region78: #{tpu_custom_call.1} parent=0
    _
  %s16 = ssub.s32 1, %s14
  %s17 = scalar_select 0, %s16, %s14
  $region1: #{tpu_custom_call.1} parent=0
    #allocation2 [shape = 'u8[32768]{0}', space=vmem, size = 0x8000, scoped, tag = 'input window, operand 0, single buffered']
    #allocation3 [shape = 's32[1]{0}', space=sflag, size = 0x4, scoped, tag = 'scoped memory for tpu_custom_call.1']
    #allocation4 [shape = 's32[1]{0}', space=sflag, size = 0x4, scoped, tag = 'scoped memory for tpu_custom_call.1']
    #allocation5 [shape = 'u8[8192]{0}', space=vmem, size = 0x2000, scoped, tag = 'input window, operand 2, single buffered']
    #allocation6 [shape = 's32[1]{0}', space=sflag, size = 0x4, scoped, tag = 'scoped memory for tpu_custom_call.1']
    #allocation7 [shape = 'u8[65536]{0}', space=vmem, size = 0x10000, scoped, tag = 'input window, operand 3, single buffered']
    #allocation8 [shape = 'u8[4096]{0}', space=vmem, size = 0x1000, scoped, tag = 'input window, operand 5, single buffered']
    #allocation9 [shape = 's32[1]{0}', space=sflag, size = 0x4, scoped, tag = 'scoped memory for tpu_custom_call.1']
    #allocation10 [shape = 'u8[2048]{0}', space=vmem, size = 0x800, scoped, tag = 'output window, operand 0, single buffered']
    %18 = vsyncpa [#allocation3], 0
    %19 = vsyncpa [#allocation6], 0
    %20 = vsyncpa [#allocation9], 0
    %21 = vsyncpa [#allocation4], 0
    // Predicated region
    $region2: #{tpu_custom_call.1} parent=1 // pred_check
      _
    $region3: #{tpu_custom_call.1} parent=1 // pred_check_branch
      %23 = sbr.rel (0) target = $region5
    $region4: #{tpu_custom_call.1} parent=1 // pred_region
      %s25 = ssub.s32 1024, 1024
      %26 = vsyncadd [#allocation3], %s25
      %s27 = sshll.u32 [#allocation2], 4
      %s28 = int_to_ptr.vmem [resolvable:$true] %s27
      %33 = dma.hbm_to_vmem [thread:$0]  %s0, 1024, %s28, [#allocation3], 128, 128, 8
    $region5: #{tpu_custom_call.1} parent=1 // pred_fallthru
      _
    // Predicated region
    $region6: #{tpu_custom_call.1} parent=1 // pred_check
      _
    $region7: #{tpu_custom_call.1} parent=1 // pred_check_branch
      %35 = sbr.rel (0) target = $region9
    $region8: #{tpu_custom_call.1} parent=1 // pred_region
      _
    $region9: #{tpu_custom_call.1} parent=1 // pred_fallthru
      _
    // Predicated region
    $region10: #{tpu_custom_call.1} parent=1 // pred_check
      _
    $region11: #{tpu_custom_call.1} parent=1 // pred_check_branch
      %37 = sbr.rel (0) target = $region13
    $region12: #{tpu_custom_call.1} parent=1 // pred_region
      %s39 = ssub.s32 256, 256
      %40 = vsyncadd [#allocation6], %s39
      %s41 = sshll.u32 [#allocation5], 4
      %s42 = int_to_ptr.vmem [resolvable:$true] %s41
      %47 = dma.hbm_to_vmem [thread:$0]  %s2, 256, %s42, [#allocation6], 128, 128, 8
    $region13: #{tpu_custom_call.1} parent=1 // pred_fallthru
      _
    // Predicated region
    $region14: #{tpu_custom_call.1} parent=1 // pred_check
      _
    $region15: #{tpu_custom_call.1} parent=1 // pred_check_branch
      %49 = sbr.rel (0) target = $region17
    $region16: #{tpu_custom_call.1} parent=1 // pred_region
      %s51 = ssub.s32 2048, 2048
      %52 = vsyncadd [#allocation6], %s51
      %s53 = sshll.u32 [#allocation7], 4
      %s54 = int_to_ptr.vmem [resolvable:$true] %s53
      %59 = dma.hbm_to_vmem [thread:$0]  %s3, 2048, %s54, [#allocation6], 128, 128, 8
    $region17: #{tpu_custom_call.1} parent=1 // pred_fallthru
      _
    // Predicated region
    $region18: #{tpu_custom_call.1} parent=1 // pred_check
      _
    $region19: #{tpu_custom_call.1} parent=1 // pred_check_branch
      %61 = sbr.rel (0) target = $region21
    $region20: #{tpu_custom_call.1} parent=1 // pred_region
      _
    $region21: #{tpu_custom_call.1} parent=1 // pred_fallthru
      _
    // Predicated region
    $region22: #{tpu_custom_call.1} parent=1 // pred_check
      _
    $region23: #{tpu_custom_call.1} parent=1 // pred_check_branch
      %63 = sbr.rel (0) target = $region25
    $region24: #{tpu_custom_call.1} parent=1 // pred_region
      %s65 = ssub.s32 128, 128
      %66 = vsyncadd [#allocation9], %s65
      %s68 = sshll.u32 [#allocation8], 4
      %s69 = int_to_ptr.vmem [resolvable:$true] %s68
      %71 = dma.hbm_to_vmem [thread:$0]  %s5, 128, %s69, [#allocation9]
    $region25: #{tpu_custom_call.1} parent=1 // pred_fallthru
      _
    // Predicated region
    $region26: #{tpu_custom_call.1} parent=1 // pred_check
      _
    $region27: #{tpu_custom_call.1} parent=1 // pred_check_branch
      %73 = sbr.rel (0) target = $region29
    $region28: #{tpu_custom_call.1} parent=1 // pred_region
      _
    $region29: #{tpu_custom_call.1} parent=1 // pred_fallthru
      _
    // Predicated region
    $region30: #{tpu_custom_call.1} parent=1 // pred_check
      _
    $region31: #{tpu_custom_call.1} parent=1 // pred_check_branch
      %75 = sbr.rel (0) target = $region33
    $region32: #{tpu_custom_call.1} parent=1 // pred_region
      _
    $region33: #{tpu_custom_call.1} parent=1 // pred_fallthru
      _
    // Predicated region
    $region34: #{tpu_custom_call.1} parent=1 // pred_check
      _
    $region35: #{tpu_custom_call.1} parent=1 // pred_check_branch
      %77 = sbr.rel (0) target = $region37
    $region36: #{tpu_custom_call.1} parent=1 // pred_region
      _
    $region37: #{tpu_custom_call.1} parent=1 // pred_fallthru
      _
    // Predicated region
    $region38: #{tpu_custom_call.1} parent=1 // pred_check
      _
    $region39: #{tpu_custom_call.1} parent=1 // pred_check_branch
      %79 = sbr.rel (0) target = $region41
    $region40: #{tpu_custom_call.1} parent=1 // pred_region
      _
    $region41: #{tpu_custom_call.1} parent=1 // pred_fallthru
      _
    // Predicated region
    $region42: #{tpu_custom_call.1} parent=1 // pred_check
      _
    $region43: #{tpu_custom_call.1} parent=1 // pred_check_branch
      %81 = sbr.rel (0) target = $region45
    $region44: #{tpu_custom_call.1} parent=1 // pred_region
      _
    $region45: #{tpu_custom_call.1} parent=1 // pred_fallthru
      _
    // Predicated region
    $region46: #{tpu_custom_call.1} parent=1 // pred_check
      _
    $region47: #{tpu_custom_call.1} parent=1 // pred_check_branch
      %83 = sbr.rel (0) target = $region49
    $region48: #{tpu_custom_call.1} parent=1 // pred_region
      _
    $region49: #{tpu_custom_call.1} parent=1 // pred_fallthru
      _
    // Predicated region
    $region50: #{tpu_custom_call.1} parent=1 // pred_check
      _
    $region51: #{tpu_custom_call.1} parent=1 // pred_check_branch
      %85 = sbr.rel (0) target = $region53
    $region52: #{tpu_custom_call.1} parent=1 // pred_region
      _
    $region53: #{tpu_custom_call.1} parent=1 // pred_fallthru
      _
    // Predicated region
    $region54: #{tpu_custom_call.1} parent=1 // pred_check
      _
    $region55: #{tpu_custom_call.1} parent=1 // pred_check_branch
      %87 = sbr.rel (0) target = $region57
    $region56: #{tpu_custom_call.1} parent=1 // pred_region
      %88 = dma.done [#allocation3], 1024
    $region57: #{tpu_custom_call.1} parent=1 // pred_fallthru
      _
    // Predicated region
    $region58: #{tpu_custom_call.1} parent=1 // pred_check
      _
    $region59: #{tpu_custom_call.1} parent=1 // pred_check_branch
      %90 = sbr.rel (0) target = $region61
    $region60: #{tpu_custom_call.1} parent=1 // pred_region
      %91 = dma.done [#allocation6], 256
    $region61: #{tpu_custom_call.1} parent=1 // pred_fallthru
      _
    // Predicated region
    $region62: #{tpu_custom_call.1} parent=1 // pred_check
      _
    $region63: #{tpu_custom_call.1} parent=1 // pred_check_branch
      %93 = sbr.rel (0) target = $region65
    $region64: #{tpu_custom_call.1} parent=1 // pred_region
      %94 = dma.done [#allocation6], 2048
    $region65: #{tpu_custom_call.1} parent=1 // pred_fallthru
      _
    // Predicated region
    $region66: #{tpu_custom_call.1} parent=1 // pred_check
      _
    $region67: #{tpu_custom_call.1} parent=1 // pred_check_branch
      %96 = sbr.rel (0) target = $region69
    $region68: #{tpu_custom_call.1} parent=1 // pred_region
      %97 = dma.done [#allocation9], 128
    $region69: #{tpu_custom_call.1} parent=1 // pred_fallthru
      _
    %v98 = vld [vmem:[#allocation2] sm:$0xff]
    %v99 = vld [vmem:[#allocation2 + $0x8] sm:$0xff]
    %v100 = vld [vmem:[#allocation2 + $0x10] sm:$0xff]
    %v101 = vld [vmem:[#allocation2 + $0x18] sm:$0xff]
    %v102 = vld [vmem:[#allocation2 + $0x20] sm:$0xff]
    %v103 = vld [vmem:[#allocation2 + $0x28] sm:$0xff]
    %v104 = vld [vmem:[#allocation2 + $0x30] sm:$0xff]
    %v105 = vld [vmem:[#allocation2 + $0x38] sm:$0xff]
    %v106 = vld [vmem:[%s1] sm:$0xff]
    %v107 = vld [vmem:[%s1 + $0x8] sm:$0xff]
    %v108 = vld [vmem:[%s1 + $0x10] sm:$0xff]
    %v109 = vld [vmem:[%s1 + $0x18] sm:$0xff]
    %v110 = vld [vmem:[%s1 + $0x20] sm:$0xff]
    %v111 = vld [vmem:[%s1 + $0x28] sm:$0xff]
    %vm112 = vcmask 523264
    %v114 = vsel %vm112, %v106, 0
    %v117 = vsel %vm112, %v107, 0
    %v120 = vsel %vm112, %v108, 0
    %v123 = vsel %vm112, %v109, 0
    %v126 = vsel %vm112, %v110, 0
    %v129 = vsel %vm112, %v111, 0
    %131 = vmatprep.subr.mxu0 0.0
    %132 = vmatpush1.msra.mxu0 %v98
    %133 = vmatprep.subr.mxu0 0.0
    %134 = vmatpush1.msra.mxu0 %v99
    %135 = vmatprep.subr.mxu0 0.0
    %136 = vmatpush1.msra.mxu0 %v100
    %137 = vmatprep.subr.mxu0 0.0
    %138 = vmatpush1.msra.mxu0 %v101
    %139 = vmatprep.subr.mxu0 0.0
    %140 = vmatpush1.msra.mxu0 %v102
    %141 = vmatprep.subr.mxu0 0.0
    %142 = vmatpush1.msra.mxu0 %v103
    %143 = vmatprep.subr.mxu0 0.0
    %144 = vmatpush1.msra.mxu0 %v104
    %145 = vmatprep.subr.mxu0 0.0
    %146 = vmatpush1.msra.mxu0 %v105
    %147 = vmatprep.subr.mxu0 0.0
    %148 = vmatpush1.msra.mxu0 0.0
    %149 = vmatprep.subr.mxu0 0.0
    %150 = vmatpush1.msra.mxu0 0.0
    %151 = vmatprep.subr.mxu0 0.0
    %152 = vmatpush1.msra.mxu0 0.0
    %153 = vmatprep.subr.mxu0 0.0
    %154 = vmatpush1.msra.mxu0 0.0
    %155 = vmatprep.subr.mxu0 0.0
    %156 = vmatpush1.msra.mxu0 0.0
    %157 = vmatprep.subr.mxu0 0.0
    %158 = vmatpush1.msra.mxu0 0.0
    %159 = vmatprep.subr.mxu0 0.0
    %160 = vmatpush1.msra.mxu0 0.0
    %161 = vmatprep.subr.mxu0 0.0
    %162 = vmatpush1.msra.mxu0 0.0
    %163 = vmatprep.subr.mxu0 0.0
    %164 = vmatpush1.msra.mxu0 0.0
    %165 = vmatprep.subr.mxu0 0.0
    %166 = vmatpush1.msra.mxu0 0.0
    %167 = vmatprep.subr.mxu0 0.0
    %168 = vmatpush1.msra.mxu0 0.0
    %169 = vmatprep.subr.mxu0 0.0
    %170 = vmatpush1.msra.mxu0 0.0
    %171 = vmatprep.subr.mxu0 0.0
    %172 = vmatpush1.msra.mxu0 0.0
    %173 = vmatprep.subr.mxu0 0.0
    %174 = vmatpush1.msra.mxu0 0.0
    %175 = vmatprep.subr.mxu0 0.0
    %176 = vmatpush1.msra.mxu0 0.0
    %177 = vmatprep.subr.mxu0 0.0
    %178 = vmatpush1.msra.mxu0 0.0
    %179 = vmatprep.subr.mxu0 0.0
    %180 = vmatpush1.msra.mxu0 0.0
    %181 = vmatprep.subr.mxu0 0.0
    %182 = vmatpush1.msra.mxu0 0.0
    %183 = vmatprep.subr.mxu0 0.0
    %184 = vmatpush1.msra.mxu0 0.0
    %185 = vmatprep.subr.mxu0 0.0
    %186 = vmatpush1.msra.mxu0 0.0
    %187 = vmatprep.subr.mxu0 0.0
    %188 = vmatpush1.msra.mxu0 0.0
    %189 = vmatprep.subr.mxu0 0.0
    %190 = vmatpush1.msra.mxu0 0.0
    %191 = vmatprep.subr.mxu0 0.0
    %192 = vmatpush1.msra.mxu0 0.0
    %193 = vmatprep.subr.mxu0 0.0
    %194 = vmatpush1.msra.mxu0 0.0
    %195 = vmatprep.mubr.f32.mxu0 0.0
    %196 = vmatmul.mubr.f32.gmra.mrb[0].mxu0 %v114
    %v197 = vpop.f32.mrb[0].mxu0
    %v198 = vadd.f32 0.0, %v197
    %v199 = vpop.f32.mrb[0].mxu0
    %200 = vmatprep.mubr.f32.mxu0 0.0
    %201 = vmatmul.mubr.f32.gmra.mrb[0].mxu0 %v117
    %v202 = vpop.f32.mrb[0].mxu0
    %v203 = vadd.f32 0.0, %v202
    %v204 = vpop.f32.mrb[0].mxu0
    %205 = vmatprep.mubr.f32.mxu0 0.0
    %206 = vmatmul.mubr.f32.gmra.mrb[0].mxu0 %v120
    %v207 = vpop.f32.mrb[0].mxu0
    %v208 = vadd.f32 0.0, %v207
    %v209 = vpop.f32.mrb[0].mxu0
    %210 = vmatprep.mubr.f32.mxu0 0.0
    %211 = vmatmul.mubr.f32.gmra.mrb[0].mxu0 %v123
    %v212 = vpop.f32.mrb[0].mxu0
    %v213 = vadd.f32 0.0, %v212
    %v214 = vpop.f32.mrb[0].mxu0
    %215 = vmatprep.mubr.f32.mxu0 0.0
    %216 = vmatmul.mubr.f32.gmra.mrb[0].mxu0 %v126
    %v217 = vpop.f32.mrb[0].mxu0
    %v218 = vadd.f32 0.0, %v217
    %v219 = vpop.f32.mrb[0].mxu0
    %220 = vmatprep.mubr.f32.mxu0 0.0
    %221 = vmatmul.mubr.f32.gmra.mrb[0].mxu0 %v129
    %v222 = vpop.f32.mrb[0].mxu0
    %v223 = vadd.f32 0.0, %v222
    %v224 = vpop.f32.mrb[0].mxu0
    %225 = vdwg.mxu0
    %v226 = vld [vmem:[#allocation7] sm:$0xff]
    %v227 = vld [vmem:[#allocation7 + $0x8] sm:$0xff]
    %v228 = vld [vmem:[#allocation7 + $0x10] sm:$0xff]
    %v229 = vld [vmem:[#allocation7 + $0x18] sm:$0xff]
    %v230 = vld [vmem:[#allocation7 + $0x20] sm:$0xff]
    %v231 = vld [vmem:[#allocation7 + $0x28] sm:$0xff]
    %v232 = vld [vmem:[#allocation7 + $0x30] sm:$0xff]
    %v233 = vld [vmem:[#allocation7 + $0x38] sm:$0xff]
    %v234 = vld [vmem:[#allocation7 + $0x40] sm:$0xff]
    %v235 = vld [vmem:[#allocation7 + $0x48] sm:$0xff]
    %v236 = vld [vmem:[#allocation7 + $0x50] sm:$0xff]
    %v237 = vld [vmem:[#allocation7 + $0x58] sm:$0xff]
    %v238 = vld [vmem:[#allocation7 + $0x60] sm:$0xff]
    %v239 = vld [vmem:[#allocation7 + $0x68] sm:$0xff]
    %v240 = vld [vmem:[#allocation7 + $0x70] sm:$0xff]
    %v241 = vld [vmem:[#allocation7 + $0x78] sm:$0xff]
    %242 = vmatprep.subr.mxu0 0.0
    %243 = vmatpush1.msra.mxu0 %v226
    %244 = vmatprep.subr.mxu0 0.0
    %245 = vmatpush1.msra.mxu0 %v227
    %246 = vmatprep.subr.mxu0 0.0
    %247 = vmatpush1.msra.mxu0 %v228
    %248 = vmatprep.subr.mxu0 0.0
    %249 = vmatpush1.msra.mxu0 %v229
    %250 = vmatprep.subr.mxu0 0.0
    %251 = vmatpush1.msra.mxu0 %v230
    %252 = vmatprep.subr.mxu0 0.0
    %253 = vmatpush1.msra.mxu0 %v231
    %254 = vmatprep.subr.mxu0 0.0
    %255 = vmatpush1.msra.mxu0 %v232
    %256 = vmatprep.subr.mxu0 0.0
    %257 = vmatpush1.msra.mxu0 %v233
    %258 = vmatprep.subr.mxu0 0.0
    %259 = vmatpush1.msra.mxu0 %v234
    %260 = vmatprep.subr.mxu0 0.0
    %261 = vmatpush1.msra.mxu0 %v235
    %262 = vmatprep.subr.mxu0 0.0
    %263 = vmatpush1.msra.mxu0 %v236
    %264 = vmatprep.subr.mxu0 0.0
    %265 = vmatpush1.msra.mxu0 %v237
    %266 = vmatprep.subr.mxu0 0.0
    %267 = vmatpush1.msra.mxu0 %v238
    %268 = vmatprep.subr.mxu0 0.0
    %269 = vmatpush1.msra.mxu0 %v239
    %270 = vmatprep.subr.mxu0 0.0
    %271 = vmatpush1.msra.mxu0 %v240
    %272 = vmatprep.subr.mxu0 0.0
    %273 = vmatpush1.msra.mxu0 %v241
    %274 = vmatprep.subr.mxu0 0.0
    %275 = vmatpush1.msra.mxu0 0.0
    %276 = vmatprep.subr.mxu0 0.0
    %277 = vmatpush1.msra.mxu0 0.0
    %278 = vmatprep.subr.mxu0 0.0
    %279 = vmatpush1.msra.mxu0 0.0
    %280 = vmatprep.subr.mxu0 0.0
    %281 = vmatpush1.msra.mxu0 0.0
    %282 = vmatprep.subr.mxu0 0.0
    %283 = vmatpush1.msra.mxu0 0.0
    %284 = vmatprep.subr.mxu0 0.0
    %285 = vmatpush1.msra.mxu0 0.0
    %286 = vmatprep.subr.mxu0 0.0
    %287 = vmatpush1.msra.mxu0 0.0
    %288 = vmatprep.subr.mxu0 0.0
    %289 = vmatpush1.msra.mxu0 0.0
    %290 = vmatprep.subr.mxu0 0.0
    %291 = vmatpush1.msra.mxu0 0.0
    %292 = vmatprep.subr.mxu0 0.0
    %293 = vmatpush1.msra.mxu0 0.0
    %294 = vmatprep.subr.mxu0 0.0
    %295 = vmatpush1.msra.mxu0 0.0
    %296 = vmatprep.subr.mxu0 0.0
    %297 = vmatpush1.msra.mxu0 0.0
    %298 = vmatprep.subr.mxu0 0.0
    %299 = vmatpush1.msra.mxu0 0.0
    %300 = vmatprep.subr.mxu0 0.0
    %301 = vmatpush1.msra.mxu0 0.0
    %302 = vmatprep.subr.mxu0 0.0
    %303 = vmatpush1.msra.mxu0 0.0
    %304 = vmatprep.subr.mxu0 0.0
    %305 = vmatpush1.msra.mxu0 0.0
    %306 = vmatprep.mubr.f32.mxu0 0.0
    %307 = vmatmul.mubr.f32.gmra.mrb[0].mxu0 %v198
    %v308 = vpop.f32.mrb[0].mxu0
    %v309 = vadd.f32 0.0, %v308
    %v310 = vpop.f32.mrb[0].mxu0
    %311 = vmatprep.mubr.f32.mxu0 0.0
    %312 = vmatmul.mubr.f32.gmra.mrb[0].mxu0 %v203
    %v313 = vpop.f32.mrb[0].mxu0
    %v314 = vadd.f32 0.0, %v313
    %v315 = vpop.f32.mrb[0].mxu0
    %316 = vmatprep.mubr.f32.mxu0 0.0
    %317 = vmatmul.mubr.f32.gmra.mrb[0].mxu0 %v208
    %v318 = vpop.f32.mrb[0].mxu0
    %v319 = vadd.f32 0.0, %v318
    %v320 = vpop.f32.mrb[0].mxu0
    %321 = vmatprep.mubr.f32.mxu0 0.0
    %322 = vmatmul.mubr.f32.gmra.mrb[0].mxu0 %v213
    %v323 = vpop.f32.mrb[0].mxu0
    %v324 = vadd.f32 0.0, %v323
    %v325 = vpop.f32.mrb[0].mxu0
    %326 = vmatprep.mubr.f32.mxu0 0.0
    %327 = vmatmul.mubr.f32.gmra.mrb[0].mxu0 %v218
    %v328 = vpop.f32.mrb[0].mxu0
    %v329 = vadd.f32 0.0, %v328
    %v330 = vpop.f32.mrb[0].mxu0
    %331 = vmatprep.mubr.f32.mxu0 0.0
    %332 = vmatmul.mubr.f32.gmra.mrb[0].mxu0 %v223
    %v333 = vpop.f32.mrb[0].mxu0
    %v334 = vadd.f32 0.0, %v333
    %v335 = vpop.f32.mrb[0].mxu0
    %336 = vdwg.mxu0
    %v337 = vld [vmem:[#allocation5] sm:$0xff]
    %v338 = vld [vmem:[#allocation5 + $0x8] sm:$0xff]
    %v339 = vld [vmem:[%s4] sm:$0x1]
    %v341 = vlaneseq
    %v342 = vshrl.u32 %v341, 7
    %v343 = vsub.s32 0, %v342
    %v344 = vrot.slane %v339, %v343
    %vm346 = vcmask 392192
    %v348 = vsel %vm346, %v337, 0
    %v351 = vsel %vm346, %v338, 0
    %353 = vmatprep.subr.mxu0 0.0
    %354 = vmatpush1.msra.mxu0 %v309
    %355 = vmatprep.subr.mxu0 0.0
    %356 = vmatpush1.msra.mxu0 %v314
    %357 = vmatprep.subr.mxu0 0.0
    %358 = vmatpush1.msra.mxu0 %v319
    %359 = vmatprep.subr.mxu0 0.0
    %360 = vmatpush1.msra.mxu0 %v324
    %361 = vmatprep.subr.mxu0 0.0
    %362 = vmatpush1.msra.mxu0 %v329
    %363 = vmatprep.subr.mxu0 0.0
    %364 = vmatpush1.msra.mxu0 %v334
    %365 = vmatprep.subr.mxu0 0.0
    %366 = vmatpush1.msra.mxu0 0.0
    %367 = vmatprep.subr.mxu0 0.0
    %368 = vmatpush1.msra.mxu0 0.0
    %369 = vmatprep.subr.mxu0 0.0
    %370 = vmatpush1.msra.mxu0 0.0
    %371 = vmatprep.subr.mxu0 0.0
    %372 = vmatpush1.msra.mxu0 0.0
    %373 = vmatprep.subr.mxu0 0.0
    %374 = vmatpush1.msra.mxu0 0.0
    %375 = vmatprep.subr.mxu0 0.0
    %376 = vmatpush1.msra.mxu0 0.0
    %377 = vmatprep.subr.mxu0 0.0
    %378 = vmatpush1.msra.mxu0 0.0
    %379 = vmatprep.subr.mxu0 0.0
    %380 = vmatpush1.msra.mxu0 0.0
    %381 = vmatprep.subr.mxu0 0.0
    %382 = vmatpush1.msra.mxu0 0.0
    %383 = vmatprep.subr.mxu0 0.0
    %384 = vmatpush1.msra.mxu0 0.0
    %385 = vmatprep.subr.mxu0 0.0
    %386 = vmatpush1.msra.mxu0 0.0
    %387 = vmatprep.subr.mxu0 0.0
    %388 = vmatpush1.msra.mxu0 0.0
    %389 = vmatprep.subr.mxu0 0.0
    %390 = vmatpush1.msra.mxu0 0.0
    %391 = vmatprep.subr.mxu0 0.0
    %392 = vmatpush1.msra.mxu0 0.0
    %393 = vmatprep.subr.mxu0 0.0
    %394 = vmatpush1.msra.mxu0 0.0
    %395 = vmatprep.subr.mxu0 0.0
    %396 = vmatpush1.msra.mxu0 0.0
    %397 = vmatprep.subr.mxu0 0.0
    %398 = vmatpush1.msra.mxu0 0.0
    %399 = vmatprep.subr.mxu0 0.0
    %400 = vmatpush1.msra.mxu0 0.0
    %401 = vmatprep.subr.mxu0 0.0
    %402 = vmatpush1.msra.mxu0 0.0
    %403 = vmatprep.subr.mxu0 0.0
    %404 = vmatpush1.msra.mxu0 0.0
    %405 = vmatprep.subr.mxu0 0.0
    %406 = vmatpush1.msra.mxu0 0.0
    %407 = vmatprep.subr.mxu0 0.0
    %408 = vmatpush1.msra.mxu0 0.0
    %409 = vmatprep.subr.mxu0 0.0
    %410 = vmatpush1.msra.mxu0 0.0
    %411 = vmatprep.subr.mxu0 0.0
    %412 = vmatpush1.msra.mxu0 0.0
    %413 = vmatprep.subr.mxu0 0.0
    %414 = vmatpush1.msra.mxu0 0.0
    %415 = vmatprep.subr.mxu0 0.0
    %416 = vmatpush1.msra.mxu0 0.0
    %417 = vmatprep.mubr.f32.mxu0 0.0
    %418 = vmatmul.mubr.f32.gmra.mrb[0].mxu0 %v348
    %v419 = vpop.f32.mrb[0].mxu0
    %v420 = vadd.f32 %v344, %v419
    %v421 = vpop.f32.mrb[0].mxu0
    %422 = vmatprep.mubr.f32.mxu0 0.0
    %423 = vmatmul.mubr.f32.gmra.mrb[0].mxu0 %v351
    %v424 = vpop.f32.mrb[0].mxu0
    %v425 = vadd.f32 %v344, %v424
    %v426 = vpop.f32.mrb[0].mxu0
    %427 = vdwg.mxu0
    %v428 = vmax.f32 %v420, 0.0
    %v429 = vmax.f32 %v425, 0.0
    %v430 = vld [vmem:[#allocation8] sm:$0xff]
    %v432 = vsel %vm112, %v430, 0
    %434 = vmatprep.subr.mxu0 0.0
    %435 = vmatpush1.msra.mxu0 %v98
    %436 = vmatprep.subr.mxu0 0.0
    %437 = vmatpush1.msra.mxu0 %v99
    %438 = vmatprep.subr.mxu0 0.0
    %439 = vmatpush1.msra.mxu0 %v100
    %440 = vmatprep.subr.mxu0 0.0
    %441 = vmatpush1.msra.mxu0 %v101
    %442 = vmatprep.subr.mxu0 0.0
    %443 = vmatpush1.msra.mxu0 %v102
    %444 = vmatprep.subr.mxu0 0.0
    %445 = vmatpush1.msra.mxu0 %v103
    %446 = vmatprep.subr.mxu0 0.0
    %447 = vmatpush1.msra.mxu0 %v104
    %448 = vmatprep.subr.mxu0 0.0
    %449 = vmatpush1.msra.mxu0 %v105
    %450 = vmatprep.subr.mxu0 0.0
    %451 = vmatpush1.msra.mxu0 0.0
    %452 = vmatprep.subr.mxu0 0.0
    %453 = vmatpush1.msra.mxu0 0.0
    %454 = vmatprep.subr.mxu0 0.0
    %455 = vmatpush1.msra.mxu0 0.0
    %456 = vmatprep.subr.mxu0 0.0
    %457 = vmatpush1.msra.mxu0 0.0
    %458 = vmatprep.subr.mxu0 0.0
    %459 = vmatpush1.msra.mxu0 0.0
    %460 = vmatprep.subr.mxu0 0.0
    %461 = vmatpush1.msra.mxu0 0.0
    %462 = vmatprep.subr.mxu0 0.0
    %463 = vmatpush1.msra.mxu0 0.0
    %464 = vmatprep.subr.mxu0 0.0
    %465 = vmatpush1.msra.mxu0 0.0
    %466 = vmatprep.subr.mxu0 0.0
    %467 = vmatpush1.msra.mxu0 0.0
    %468 = vmatprep.subr.mxu0 0.0
    %469 = vmatpush1.msra.mxu0 0.0
    %470 = vmatprep.subr.mxu0 0.0
    %471 = vmatpush1.msra.mxu0 0.0
    %472 = vmatprep.subr.mxu0 0.0
    %473 = vmatpush1.msra.mxu0 0.0
    %474 = vmatprep.subr.mxu0 0.0
    %475 = vmatpush1.msra.mxu0 0.0
    %476 = vmatprep.subr.mxu0 0.0
    %477 = vmatpush1.msra.mxu0 0.0
    %478 = vmatprep.subr.mxu0 0.0
    %479 = vmatpush1.msra.mxu0 0.0
    %480 = vmatprep.subr.mxu0 0.0
    %481 = vmatpush1.msra.mxu0 0.0
    %482 = vmatprep.subr.mxu0 0.0
    %483 = vmatpush1.msra.mxu0 0.0
    %484 = vmatprep.subr.mxu0 0.0
    %485 = vmatpush1.msra.mxu0 0.0
    %486 = vmatprep.subr.mxu0 0.0
    %487 = vmatpush1.msra.mxu0 0.0
    %488 = vmatprep.subr.mxu0 0.0
    %489 = vmatpush1.msra.mxu0 0.0
    %490 = vmatprep.subr.mxu0 0.0
    %491 = vmatpush1.msra.mxu0 0.0
    %492 = vmatprep.subr.mxu0 0.0
    %493 = vmatpush1.msra.mxu0 0.0
    %494 = vmatprep.subr.mxu0 0.0
    %495 = vmatpush1.msra.mxu0 0.0
    %496 = vmatprep.subr.mxu0 0.0
    %497 = vmatpush1.msra.mxu0 0.0
    %498 = vmatprep.mubr.f32.mxu0 0.0
    %499 = vmatmul.mubr.f32.gmra.mrb[0].mxu0 %v432
    %v500 = vpop.f32.mrb[0].mxu0
    %v501 = vadd.f32 0.0, %v500
    %v502 = vpop.f32.mrb[0].mxu0
    %503 = vdwg.mxu0
    %v504 = vld [vmem:[%s6] sm:$0xff]
    %v505 = vld [vmem:[%s6 + $0x8] sm:$0xff]
    %vm506 = vcmask 130048
    %v508 = vsel %vm506, %v504, 0
    %v511 = vsel %vm506, %v505, 0
    %513 = vmatprep.subr.mxu0 0.0
    %514 = vmatpush1.msra.mxu0 %v428
    %515 = vmatprep.subr.mxu0 0.0
    %516 = vmatpush1.msra.mxu0 %v429
    %517 = vmatprep.subr.mxu0 0.0
    %518 = vmatpush1.msra.mxu0 0.0
    %519 = vmatprep.subr.mxu0 0.0
    %520 = vmatpush1.msra.mxu0 0.0
    %521 = vmatprep.subr.mxu0 0.0
    %522 = vmatpush1.msra.mxu0 0.0
    %523 = vmatprep.subr.mxu0 0.0
    %524 = vmatpush1.msra.mxu0 0.0
    %525 = vmatprep.subr.mxu0 0.0
    %526 = vmatpush1.msra.mxu0 0.0
    %527 = vmatprep.subr.mxu0 0.0
    %528 = vmatpush1.msra.mxu0 0.0
    %529 = vmatprep.subr.mxu0 0.0
    %530 = vmatpush1.msra.mxu0 0.0
    %531 = vmatprep.subr.mxu0 0.0
    %532 = vmatpush1.msra.mxu0 0.0
    %533 = vmatprep.subr.mxu0 0.0
    %534 = vmatpush1.msra.mxu0 0.0
    %535 = vmatprep.subr.mxu0 0.0
    %536 = vmatpush1.msra.mxu0 0.0
    %537 = vmatprep.subr.mxu0 0.0
    %538 = vmatpush1.msra.mxu0 0.0
    %539 = vmatprep.subr.mxu0 0.0
    %540 = vmatpush1.msra.mxu0 0.0
    %541 = vmatprep.subr.mxu0 0.0
    %542 = vmatpush1.msra.mxu0 0.0
    %543 = vmatprep.subr.mxu0 0.0
    %544 = vmatpush1.msra.mxu0 0.0
    %545 = vmatprep.subr.mxu0 0.0
    %546 = vmatpush1.msra.mxu0 0.0
    %547 = vmatprep.subr.mxu0 0.0
    %548 = vmatpush1.msra.mxu0 0.0
    %549 = vmatprep.subr.mxu0 0.0
    %550 = vmatpush1.msra.mxu0 0.0
    %551 = vmatprep.subr.mxu0 0.0
    %552 = vmatpush1.msra.mxu0 0.0
    %553 = vmatprep.subr.mxu0 0.0
    %554 = vmatpush1.msra.mxu0 0.0
    %555 = vmatprep.subr.mxu0 0.0
    %556 = vmatpush1.msra.mxu0 0.0
    %557 = vmatprep.subr.mxu0 0.0
    %558 = vmatpush1.msra.mxu0 0.0
    %559 = vmatprep.subr.mxu0 0.0
    %560 = vmatpush1.msra.mxu0 0.0
    %561 = vmatprep.subr.mxu0 0.0
    %562 = vmatpush1.msra.mxu0 0.0
    %563 = vmatprep.subr.mxu0 0.0
    %564 = vmatpush1.msra.mxu0 0.0
    %565 = vmatprep.subr.mxu0 0.0
    %566 = vmatpush1.msra.mxu0 0.0
    %567 = vmatprep.subr.mxu0 0.0
    %568 = vmatpush1.msra.mxu0 0.0
    %569 = vmatprep.subr.mxu0 0.0
    %570 = vmatpush1.msra.mxu0 0.0
    %571 = vmatprep.subr.mxu0 0.0
    %572 = vmatpush1.msra.mxu0 0.0
    %573 = vmatprep.subr.mxu0 0.0
    %574 = vmatpush1.msra.mxu0 0.0
    %575 = vmatprep.subr.mxu0 0.0
    %576 = vmatpush1.msra.mxu0 0.0
    %577 = vmatprep.mubr.f32.mxu0 0.0
    %578 = vmatmul.mubr.f32.gmra.mrb[0].mxu0 %v508
    %v579 = vpop.f32.mrb[0].mxu0
    %v580 = vadd.f32 0.0, %v579
    %v581 = vpop.f32.mrb[0].mxu0
    %582 = vmatprep.mubr.f32.mxu0 0.0
    %583 = vmatmul.mubr.f32.gmra.mrb[0].mxu0 %v511
    %v584 = vpop.f32.mrb[0].mxu0
    %v585 = vadd.f32 0.0, %v584
    %v586 = vpop.f32.mrb[0].mxu0
    %587 = vdwg.mxu0
    %v588 = vld [vmem:[%s7] sm:$0xff]
    %v589 = vld [vmem:[%s7 + $0x8] sm:$0xff]
    %vm590 = vcmask 64512
    %v592 = vsel %vm590, %v588, 0
    %v595 = vsel %vm590, %v589, 0
    %597 = vmatprep.subr.mxu0 0.0
    %598 = vmatpush1.msra.mxu0 %v501
    %599 = vmatprep.subr.mxu0 0.0
    %600 = vmatpush1.msra.mxu0 0.0
    %601 = vmatprep.subr.mxu0 0.0
    %602 = vmatpush1.msra.mxu0 0.0
    %603 = vmatprep.subr.mxu0 0.0
    %604 = vmatpush1.msra.mxu0 0.0
    %605 = vmatprep.subr.mxu0 0.0
    %606 = vmatpush1.msra.mxu0 0.0
    %607 = vmatprep.subr.mxu0 0.0
    %608 = vmatpush1.msra.mxu0 0.0
    %609 = vmatprep.subr.mxu0 0.0
    %610 = vmatpush1.msra.mxu0 0.0
    %611 = vmatprep.subr.mxu0 0.0
    %612 = vmatpush1.msra.mxu0 0.0
    %613 = vmatprep.subr.mxu0 0.0
    %614 = vmatpush1.msra.mxu0 0.0
    %615 = vmatprep.subr.mxu0 0.0
    %616 = vmatpush1.msra.mxu0 0.0
    %617 = vmatprep.subr.mxu0 0.0
    %618 = vmatpush1.msra.mxu0 0.0
    %619 = vmatprep.subr.mxu0 0.0
    %620 = vmatpush1.msra.mxu0 0.0
    %621 = vmatprep.subr.mxu0 0.0
    %622 = vmatpush1.msra.mxu0 0.0
    %623 = vmatprep.subr.mxu0 0.0
    %624 = vmatpush1.msra.mxu0 0.0
    %625 = vmatprep.subr.mxu0 0.0
    %626 = vmatpush1.msra.mxu0 0.0
    %627 = vmatprep.subr.mxu0 0.0
    %628 = vmatpush1.msra.mxu0 0.0
    %629 = vmatprep.subr.mxu0 0.0
    %630 = vmatpush1.msra.mxu0 0.0
    %631 = vmatprep.subr.mxu0 0.0
    %632 = vmatpush1.msra.mxu0 0.0
    %633 = vmatprep.subr.mxu0 0.0
    %634 = vmatpush1.msra.mxu0 0.0
    %635 = vmatprep.subr.mxu0 0.0
    %636 = vmatpush1.msra.mxu0 0.0
    %637 = vmatprep.subr.mxu0 0.0
    %638 = vmatpush1.msra.mxu0 0.0
    %639 = vmatprep.subr.mxu0 0.0
    %640 = vmatpush1.msra.mxu0 0.0
    %641 = vmatprep.subr.mxu0 0.0
    %642 = vmatpush1.msra.mxu0 0.0
    %643 = vmatprep.subr.mxu0 0.0
    %644 = vmatpush1.msra.mxu0 0.0
    %645 = vmatprep.subr.mxu0 0.0
    %646 = vmatpush1.msra.mxu0 0.0
    %647 = vmatprep.subr.mxu0 0.0
    %648 = vmatpush1.msra.mxu0 0.0
    %649 = vmatprep.subr.mxu0 0.0
    %650 = vmatpush1.msra.mxu0 0.0
    %651 = vmatprep.subr.mxu0 0.0
    %652 = vmatpush1.msra.mxu0 0.0
    %653 = vmatprep.subr.mxu0 0.0
    %654 = vmatpush1.msra.mxu0 0.0
    %655 = vmatprep.subr.mxu0 0.0
    %656 = vmatpush1.msra.mxu0 0.0
    %657 = vmatprep.subr.mxu0 0.0
    %658 = vmatpush1.msra.mxu0 0.0
    %659 = vmatprep.subr.mxu0 0.0
    %660 = vmatpush1.msra.mxu0 0.0
    %661 = vmatprep.mubr.f32.mxu0 0.0
    %662 = vmatmul.mubr.f32.gmra.mrb[0].mxu0 %v592
    %v663 = vpop.f32.mrb[0].mxu0
    %v664 = vadd.f32 0.0, %v663
    %v665 = vpop.f32.mrb[0].mxu0
    %666 = vmatprep.mubr.f32.mxu0 0.0
    %667 = vmatmul.mubr.f32.gmra.mrb[0].mxu0 %v595
    %v668 = vpop.f32.mrb[0].mxu0
    %v669 = vadd.f32 0.0, %v668
    %v670 = vpop.f32.mrb[0].mxu0
    %671 = vdwg.mxu0
    %v672 = vsub.f32 %v664, %v580
    %v673 = vsub.f32 %v669, %v585
    %v674 = vadd.f32 %v672, 1e-06
    %v675 = vadd.f32 %v673, 1e-06
    %v676 = vmul.f32 %v674, %v674
    %v677 = vmul.f32 %v675, %v675
    %678 = vadd.xlane.f32.xlu0 %v676
    %v679 = vpop.xlane.xlu0 %678
    %680 = vadd.xlane.f32.xlu0 %v677
    %v681 = vpop.xlane.xlu0 %680
    %v682 = vrsqrt.pop %v679
    %v683 = vmul.f32 %v679, %v682
    %vm684 = vcmp.eq.f32.partialorder %v679, inf
    %v685 = vsel %vm684, %v679, %v683
    %vm686 = vcmp.eq.f32.partialorder %v679, 0.0
    %v687 = vand.u32 %v679, 2147483648
    %v688 = vsel %vm686, %v687, %v685
    %v689 = vrsqrt.pop %v681
    %v690 = vmul.f32 %v681, %v689
    %vm691 = vcmp.eq.f32.partialorder %v681, inf
    %v692 = vsel %vm691, %v681, %v690
    %vm693 = vcmp.eq.f32.partialorder %v681, 0.0
    %v694 = vand.u32 %v681, 2147483648
    %v695 = vsel %vm693, %v694, %v692
    %v696 = vld [vmem:[%s9] sm:$0xff]
    %v697 = vld [vmem:[%s9 + $0x8] sm:$0xff]
    %v698 = vadd.f32 %v688, %v696
    %v699 = vadd.f32 %v695, %v697
    %vm700 = vcmask 7168
    %v701 = vsel %vm700, %v698, -inf
    %v702 = vsel %vm700, %v699, -inf
    %v703 = vmax.f32 %v701, %v702
    %704 = vmax.xlane.f32.xlu0 %v703
    %v705 = vpop.xlane.xlu0 %704
    %v706 = vrot.slane %v705, 4
    %v707 = vmax.f32 %v705, %v706
    %v708 = vrot.slane %v707, 2
    %v709 = vmax.f32 %v707, %v708
    %v710 = vrot.slane %v709, 1
    %v711 = vmax.f32 %v709, %v710
    %s712 = vtos %v711
    %v713 = vstv %s712
    %v714 = vsub.f32 %v698, %v713
    %v715 = vsub.f32 %v699, %v713
    %v716 = vmul.f32 %v714, 1.442695
    %v717 = vpow.pop %v716
    %v718 = vmul.f32 %v715, 1.442695
    %v719 = vpow.pop %v718
    %721 = vset.pattern.permute.xlu0 0
    %722 = vperm.xlu0 %721, %v717
    %v723 = vpop.permute.xlu0 %722
    %726 = vset.pattern.permute.xlu0 0
    %727 = vperm.xlu0 %726, %v719
    %v728 = vpop.permute.xlu0 %727
    %v730 = vld [vmem:[%s8] sm:$0xff]
    %v732 = vsel %vm506, %v730, 0
    %734 = vmatprep.subr.mxu0 0.0
    %735 = vmatpush1.msra.mxu0 %v723
    %736 = vmatprep.subr.mxu0 0.0
    %737 = vmatpush1.msra.mxu0 %v728
    %738 = vmatprep.subr.mxu0 0.0
    %739 = vmatpush1.msra.mxu0 0.0
    %740 = vmatprep.subr.mxu0 0.0
    %741 = vmatpush1.msra.mxu0 0.0
    %742 = vmatprep.subr.mxu0 0.0
    %743 = vmatpush1.msra.mxu0 0.0
    %744 = vmatprep.subr.mxu0 0.0
    %745 = vmatpush1.msra.mxu0 0.0
    %746 = vmatprep.subr.mxu0 0.0
    %747 = vmatpush1.msra.mxu0 0.0
    %748 = vmatprep.subr.mxu0 0.0
    %749 = vmatpush1.msra.mxu0 0.0
    %750 = vmatprep.subr.mxu0 0.0
    %751 = vmatpush1.msra.mxu0 0.0
    %752 = vmatprep.subr.mxu0 0.0
    %753 = vmatpush1.msra.mxu0 0.0
    %754 = vmatprep.subr.mxu0 0.0
    %755 = vmatpush1.msra.mxu0 0.0
    %756 = vmatprep.subr.mxu0 0.0
    %757 = vmatpush1.msra.mxu0 0.0
    %758 = vmatprep.subr.mxu0 0.0
    %759 = vmatpush1.msra.mxu0 0.0
    %760 = vmatprep.subr.mxu0 0.0
    %761 = vmatpush1.msra.mxu0 0.0
    %762 = vmatprep.subr.mxu0 0.0
    %763 = vmatpush1.msra.mxu0 0.0
    %764 = vmatprep.subr.mxu0 0.0
    %765 = vmatpush1.msra.mxu0 0.0
    %766 = vmatprep.subr.mxu0 0.0
    %767 = vmatpush1.msra.mxu0 0.0
    %768 = vmatprep.subr.mxu0 0.0
    %769 = vmatpush1.msra.mxu0 0.0
    %770 = vmatprep.subr.mxu0 0.0
    %771 = vmatpush1.msra.mxu0 0.0
    %772 = vmatprep.subr.mxu0 0.0
    %773 = vmatpush1.msra.mxu0 0.0
    %774 = vmatprep.subr.mxu0 0.0
    %775 = vmatpush1.msra.mxu0 0.0
    %776 = vmatprep.subr.mxu0 0.0
    %777 = vmatpush1.msra.mxu0 0.0
    %778 = vmatprep.subr.mxu0 0.0
    %779 = vmatpush1.msra.mxu0 0.0
    %780 = vmatprep.subr.mxu0 0.0
    %781 = vmatpush1.msra.mxu0 0.0
    %782 = vmatprep.subr.mxu0 0.0
    %783 = vmatpush1.msra.mxu0 0.0
    %784 = vmatprep.subr.mxu0 0.0
    %785 = vmatpush1.msra.mxu0 0.0
    %786 = vmatprep.subr.mxu0 0.0
    %787 = vmatpush1.msra.mxu0 0.0
    %788 = vmatprep.subr.mxu0 0.0
    %789 = vmatpush1.msra.mxu0 0.0
    %790 = vmatprep.subr.mxu0 0.0
    %791 = vmatpush1.msra.mxu0 0.0
    %792 = vmatprep.subr.mxu0 0.0
    %793 = vmatpush1.msra.mxu0 0.0
    %794 = vmatprep.subr.mxu0 0.0
    %795 = vmatpush1.msra.mxu0 0.0
    %796 = vmatprep.subr.mxu0 0.0
    %797 = vmatpush1.msra.mxu0 0.0
    %798 = vmatprep.mubr.f32.mxu0 0.0
    %799 = vmatmul.mubr.f32.gmra.mrb[0].mxu0 %v732
    %v800 = vpop.f32.mrb[0].mxu0
    %v801 = vadd.f32 0.0, %v800
    %v802 = vpop.f32.mrb[0].mxu0
    %803 = vdwg.mxu0
    %804 = vmatprep.subr.mxu0 0.0
    %805 = vmatpush1.msra.mxu0 %v801
    %806 = vmatprep.subr.mxu0 0.0
    %807 = vmatpush1.msra.mxu0 0.0
    %808 = vmatprep.subr.mxu0 0.0
    %809 = vmatpush1.msra.mxu0 0.0
    %810 = vmatprep.subr.mxu0 0.0
    %811 = vmatpush1.msra.mxu0 0.0
    %812 = vmatprep.subr.mxu0 0.0
    %813 = vmatpush1.msra.mxu0 0.0
    %814 = vmatprep.subr.mxu0 0.0
    %815 = vmatpush1.msra.mxu0 0.0
    %816 = vmatprep.subr.mxu0 0.0
    %817 = vmatpush1.msra.mxu0 0.0
    %818 = vmatprep.subr.mxu0 0.0
    %819 = vmatpush1.msra.mxu0 0.0
    %820 = vmatprep.subr.mxu0 0.0
    %821 = vmatpush1.msra.mxu0 0.0
    %822 = vmatprep.subr.mxu0 0.0
    %823 = vmatpush1.msra.mxu0 0.0
    %824 = vmatprep.subr.mxu0 0.0
    %825 = vmatpush1.msra.mxu0 0.0
    %826 = vmatprep.subr.mxu0 0.0
    %827 = vmatpush1.msra.mxu0 0.0
    %828 = vmatprep.subr.mxu0 0.0
    %829 = vmatpush1.msra.mxu0 0.0
    %830 = vmatprep.subr.mxu0 0.0
    %831 = vmatpush1.msra.mxu0 0.0
    %832 = vmatprep.subr.mxu0 0.0
    %833 = vmatpush1.msra.mxu0 0.0
    %834 = vmatprep.subr.mxu0 0.0
    %835 = vmatpush1.msra.mxu0 0.0
    %836 = vmatprep.subr.mxu0 0.0
    %837 = vmatpush1.msra.mxu0 0.0
    %838 = vmatprep.subr.mxu0 0.0
    %839 = vmatpush1.msra.mxu0 0.0
    %840 = vmatprep.subr.mxu0 0.0
    %841 = vmatpush1.msra.mxu0 0.0
    %842 = vmatprep.subr.mxu0 0.0
    %843 = vmatpush1.msra.mxu0 0.0
    %844 = vmatprep.subr.mxu0 0.0
    %845 = vmatpush1.msra.mxu0 0.0
    %846 = vmatprep.subr.mxu0 0.0
    %847 = vmatpush1.msra.mxu0 0.0
    %848 = vmatprep.subr.mxu0 0.0
    %849 = vmatpush1.msra.mxu0 0.0
    %850 = vmatprep.subr.mxu0 0.0
    %851 = vmatpush1.msra.mxu0 0.0
    %852 = vmatprep.subr.mxu0 0.0
    %853 = vmatpush1.msra.mxu0 0.0
    %854 = vmatprep.subr.mxu0 0.0
    %855 = vmatpush1.msra.mxu0 0.0
    %856 = vmatprep.subr.mxu0 0.0
    %857 = vmatpush1.msra.mxu0 0.0
    %858 = vmatprep.subr.mxu0 0.0
    %859 = vmatpush1.msra.mxu0 0.0
    %860 = vmatprep.subr.mxu0 0.0
    %861 = vmatpush1.msra.mxu0 0.0
    %862 = vmatprep.subr.mxu0 0.0
    %863 = vmatpush1.msra.mxu0 0.0
    %864 = vmatprep.subr.mxu0 0.0
    %865 = vmatpush1.msra.mxu0 0.0
    %866 = vmatprep.subr.mxu0 0.0
    %867 = vmatpush1.msra.mxu0 0.0
    %868 = vmatprep.mubr.f32.mxu0 0.0
    %869 = vmatmul.mubr.f32.gmra.mrb[0].mxu0 %v592
    %v870 = vpop.f32.mrb[0].mxu0
    %v871 = vadd.f32 0.0, %v870
    %v872 = vpop.f32.mrb[0].mxu0
    %873 = vmatprep.mubr.f32.mxu0 0.0
    %874 = vmatmul.mubr.f32.gmra.mrb[0].mxu0 %v595
    %v875 = vpop.f32.mrb[0].mxu0
    %v876 = vadd.f32 0.0, %v875
    %v877 = vpop.f32.mrb[0].mxu0
    %878 = vdwg.mxu0
    %v879 = vmax.f32 %v871, 1e-30
    %v880 = vmax.f32 %v876, 1e-30
    %v881 = vrcp.pop %v879
    %v882 = vmul.f32 %v723, %v881
    %v883 = vrcp.pop %v880
    %v884 = vmul.f32 %v728, %v883
    %v885 = vmul.f32 %v882, %v580
    %v886 = vmul.f32 %v884, %v585
    %887 = vmatprep.subr.mxu0 0.0
    %888 = vmatpush1.msra.mxu0 %v885
    %889 = vmatprep.subr.mxu0 0.0
    %890 = vmatpush1.msra.mxu0 %v886
    %891 = vmatprep.subr.mxu0 0.0
    %892 = vmatpush1.msra.mxu0 0.0
    %893 = vmatprep.subr.mxu0 0.0
    %894 = vmatpush1.msra.mxu0 0.0
    %895 = vmatprep.subr.mxu0 0.0
    %896 = vmatpush1.msra.mxu0 0.0
    %897 = vmatprep.subr.mxu0 0.0
    %898 = vmatpush1.msra.mxu0 0.0
    %899 = vmatprep.subr.mxu0 0.0
    %900 = vmatpush1.msra.mxu0 0.0
    %901 = vmatprep.subr.mxu0 0.0
    %902 = vmatpush1.msra.mxu0 0.0
    %903 = vmatprep.subr.mxu0 0.0
    %904 = vmatpush1.msra.mxu0 0.0
    %905 = vmatprep.subr.mxu0 0.0
    %906 = vmatpush1.msra.mxu0 0.0
    %907 = vmatprep.subr.mxu0 0.0
    %908 = vmatpush1.msra.mxu0 0.0
    %909 = vmatprep.subr.mxu0 0.0
    %910 = vmatpush1.msra.mxu0 0.0
    %911 = vmatprep.subr.mxu0 0.0
    %912 = vmatpush1.msra.mxu0 0.0
    %913 = vmatprep.subr.mxu0 0.0
    %914 = vmatpush1.msra.mxu0 0.0
    %915 = vmatprep.subr.mxu0 0.0
    %916 = vmatpush1.msra.mxu0 0.0
    %917 = vmatprep.subr.mxu0 0.0
    %918 = vmatpush1.msra.mxu0 0.0
    %919 = vmatprep.subr.mxu0 0.0
    %920 = vmatpush1.msra.mxu0 0.0
    %921 = vmatprep.subr.mxu0 0.0
    %922 = vmatpush1.msra.mxu0 0.0
    %923 = vmatprep.subr.mxu0 0.0
    %924 = vmatpush1.msra.mxu0 0.0
    %925 = vmatprep.subr.mxu0 0.0
    %926 = vmatpush1.msra.mxu0 0.0
    %927 = vmatprep.subr.mxu0 0.0
    %928 = vmatpush1.msra.mxu0 0.0
    %929 = vmatprep.subr.mxu0 0.0
    %930 = vmatpush1.msra.mxu0 0.0
    %931 = vmatprep.subr.mxu0 0.0
    %932 = vmatpush1.msra.mxu0 0.0
    %933 = vmatprep.subr.mxu0 0.0
    %934 = vmatpush1.msra.mxu0 0.0
    %935 = vmatprep.subr.mxu0 0.0
    %936 = vmatpush1.msra.mxu0 0.0
    %937 = vmatprep.subr.mxu0 0.0
    %938 = vmatpush1.msra.mxu0 0.0
    %939 = vmatprep.subr.mxu0 0.0
    %940 = vmatpush1.msra.mxu0 0.0
    %941 = vmatprep.subr.mxu0 0.0
    %942 = vmatpush1.msra.mxu0 0.0
    %943 = vmatprep.subr.mxu0 0.0
    %944 = vmatpush1.msra.mxu0 0.0
    %945 = vmatprep.subr.mxu0 0.0
    %946 = vmatpush1.msra.mxu0 0.0
    %947 = vmatprep.subr.mxu0 0.0
    %948 = vmatpush1.msra.mxu0 0.0
    %949 = vmatprep.subr.mxu0 0.0
    %950 = vmatpush1.msra.mxu0 0.0
    %951 = vmatprep.mubr.f32.mxu0 0.0
    %952 = vmatmul.mubr.f32.gmra.mrb[0].mxu0 %v732
    %v953 = vpop.f32.mrb[0].mxu0
    %v954 = vadd.f32 0.0, %v953
    %v955 = vpop.f32.mrb[0].mxu0
    %956 = vdwg.mxu0
    %v957 = vld [vmem:[%s10] sm:$0xff]
    %959 = vset.pattern.permute.xlu0 0
    %960 = vperm.xlu0 %959, %v957
    %v961 = vpop.permute.xlu0 %960
    %v963 = vmul.f32 %v954, %v961
    %v964 = vadd.f32 %v963, %v501
    %v965 = vmul.f32 %v964, 0.5
    %v966 = vld [vmem:[%s11] sm:$0xf]
    %v968 = vsel %vm590, %v966, 0
    %970 = vmatprep.subr.mxu0 0.0
    %971 = vmatpush1.msra.mxu0 %v965
    %972 = vmatprep.subr.mxu0 0.0
    %973 = vmatpush1.msra.mxu0 0.0
    %974 = vmatprep.subr.mxu0 0.0
    %975 = vmatpush1.msra.mxu0 0.0
    %976 = vmatprep.subr.mxu0 0.0
    %977 = vmatpush1.msra.mxu0 0.0
    %978 = vmatprep.subr.mxu0 0.0
    %979 = vmatpush1.msra.mxu0 0.0
    %980 = vmatprep.subr.mxu0 0.0
    %981 = vmatpush1.msra.mxu0 0.0
    %982 = vmatprep.subr.mxu0 0.0
    %983 = vmatpush1.msra.mxu0 0.0
    %984 = vmatprep.subr.mxu0 0.0
    %985 = vmatpush1.msra.mxu0 0.0
    %986 = vmatprep.subr.mxu0 0.0
    %987 = vmatpush1.msra.mxu0 0.0
    %988 = vmatprep.subr.mxu0 0.0
    %989 = vmatpush1.msra.mxu0 0.0
    %990 = vmatprep.subr.mxu0 0.0
    %991 = vmatpush1.msra.mxu0 0.0
    %992 = vmatprep.subr.mxu0 0.0
    %993 = vmatpush1.msra.mxu0 0.0
    %994 = vmatprep.subr.mxu0 0.0
    %995 = vmatpush1.msra.mxu0 0.0
    %996 = vmatprep.subr.mxu0 0.0
    %997 = vmatpush1.msra.mxu0 0.0
    %998 = vmatprep.subr.mxu0 0.0
    %999 = vmatpush1.msra.mxu0 0.0
    %1000 = vmatprep.subr.mxu0 0.0
    %1001 = vmatpush1.msra.mxu0 0.0
    %1002 = vmatprep.subr.mxu0 0.0
    %1003 = vmatpush1.msra.mxu0 0.0
    %1004 = vmatprep.subr.mxu0 0.0
    %1005 = vmatpush1.msra.mxu0 0.0
    %1006 = vmatprep.subr.mxu0 0.0
    %1007 = vmatpush1.msra.mxu0 0.0
    %1008 = vmatprep.subr.mxu0 0.0
    %1009 = vmatpush1.msra.mxu0 0.0
    %1010 = vmatprep.subr.mxu0 0.0
    %1011 = vmatpush1.msra.mxu0 0.0
    %1012 = vmatprep.subr.mxu0 0.0
    %1013 = vmatpush1.msra.mxu0 0.0
    %1014 = vmatprep.subr.mxu0 0.0
    %1015 = vmatpush1.msra.mxu0 0.0
    %1016 = vmatprep.subr.mxu0 0.0
    %1017 = vmatpush1.msra.mxu0 0.0
    %1018 = vmatprep.subr.mxu0 0.0
    %1019 = vmatpush1.msra.mxu0 0.0
    %1020 = vmatprep.subr.mxu0 0.0
    %1021 = vmatpush1.msra.mxu0 0.0
    %1022 = vmatprep.subr.mxu0 0.0
    %1023 = vmatpush1.msra.mxu0 0.0
    %1024 = vmatprep.subr.mxu0 0.0
    %1025 = vmatpush1.msra.mxu0 0.0
    %1026 = vmatprep.subr.mxu0 0.0
    %1027 = vmatpush1.msra.mxu0 0.0
    %1028 = vmatprep.subr.mxu0 0.0
    %1029 = vmatpush1.msra.mxu0 0.0
    %1030 = vmatprep.subr.mxu0 0.0
    %1031 = vmatpush1.msra.mxu0 0.0
    %1032 = vmatprep.subr.mxu0 0.0
    %1033 = vmatpush1.msra.mxu0 0.0
    %1034 = vmatprep.mubr.f32.mxu0 0.0
    %1035 = vmatmul.mubr.f32.gmra.mrb[0].mxu0 %v968
    %v1036 = vpop.f32.mrb[0].mxu0
    %v1037 = vadd.f32 0.0, %v1036
    %v1038 = vpop.f32.mrb[0].mxu0
    %1039 = vdwg.mxu0
    %v1040 = vld [vmem:[%s12] sm:$0xf]
    %vm1041 = vcmp.gt.f32.partialorder %v1040, 0.0
    %v1042 = vsel %vm1041, 1, 0
    %1043 = vset.pattern.permute.xlu0 0
    %1044 = vperm.xlu0 %1043, %v1042
    %v1045 = vpop.permute.xlu0 %1044
    %vm1046 = vcmp.eq.s32.totalorder %v1045, 1
    %v1047 = vsel %vm1046, %v1037, 1.0
    %1048 = vst [vmem:[#allocation10] sm:$0xf] %v1047
    // Predicated region
    $region70: #{tpu_custom_call.1} parent=1 // pred_check
      _
    $region71: #{tpu_custom_call.1} parent=1 // pred_check_branch
      %1050 = sbr.rel (0) target = $region73
    $region72: #{tpu_custom_call.1} parent=1 // pred_region
      %s1052 = ssub.s32 64, 64
      %1053 = vsyncadd [#allocation4], %s1052
      %s1055 = sshll.u32 [#allocation10], 4
      %s1056 = int_to_ptr.vmem [resolvable:$true] %s1055
      %1058 = dma.vmem_to_hbm [thread:$0]  %s1056, 64, %s13, [#allocation4]
    $region73: #{tpu_custom_call.1} parent=1 // pred_fallthru
      _
    // Predicated region
    $region74: #{tpu_custom_call.1} parent=1 // pred_check
      _
    $region75: #{tpu_custom_call.1} parent=1 // pred_check_branch
      %1060 = sbr.rel (0) target = $region77
    $region76: #{tpu_custom_call.1} parent=1 // pred_region
      %1061 = dma.done [#allocation4], 64
    $region77: #{tpu_custom_call.1} parent=1 // pred_fallthru
      _
    %1062 = vsyncpa [#allocation3], 1
    %1063 = vsyncpa [#allocation6], 1
    %1064 = vsyncpa [#allocation9], 1
    %1065 = vsyncpa [#allocation4], 1

</llo_original>
